<compile_context>
chip_gen: v5e
topology: v5e:2x2
jax: 0.10.0
libtpu: 0.0.40
codegen_flags: <defaults>
</compile_context>

<pallas_src>
import jax
import jax.numpy as jnp
import numpy as np
from jax import lax
from jax.experimental import pallas as pl
from jax.experimental.pallas import tpu as pltpu


# ----------------------------------------------------------------------------
# Pallas kernels
# ----------------------------------------------------------------------------
def conv_relu_pool_kernel(p_ref, w_ref, b_ref, o_ref):
    """One conv layer fused with 2x2 max-pool + bias + ReLU.

    p_ref: (4, Kp, T)  im2col patches (bf16); axis 0 = the four positions of
                       the 2x2 pooling window, Kp sublane-padded K, T rows on
                       lanes (128-multiple tile).
    w_ref: (Cout, Kp)  conv weights, K zero-padded, bf16 (resident).
    b_ref: (Cout, 1)   bias column, f32 (resident).
    o_ref: (Cout, T)   pooled activations, channel-major, bf16 (lane-dense).
    """
    w = w_ref[...]
    # Four (Cout,Kp)x(Kp,T) MXU contractions with a running max: the 2x2 pool
    # over f32 accumulators.  No reshape of the patch block is needed.
    m = lax.dot_general(w, p_ref[0], (((1,), (0,)), ((), ())),
                        preferred_element_type=jnp.float32)
    for win in range(1, p_ref.shape[0]):
        s = lax.dot_general(w, p_ref[win], (((1,), (0,)), ((), ())),
                            preferred_element_type=jnp.float32)
        m = jnp.maximum(m, s)
    # Bias + ReLU once, after the pool (max(x)+b == max(x+b); ReLU monotone).
    o_ref[...] = jnp.maximum(m + b_ref[...], 0.0).astype(o_ref.dtype)


def fc_logsoftmax_kernel(y_ref, w_ref, b_ref, o_ref):
    """Linear(320->10) + log_softmax, consuming channel-major conv2 output.

    y_ref: (20, Nt, 16) pooled conv2 activations (bf16), per-channel blocks.
    w_ref: (20, 10, 16) fc weight re-arranged as (cin, class, spatial), bf16.
    b_ref: (1, 10)      bias, f32.
    o_ref: (Nt, 10)     log-probabilities, f32.
    """
    c = y_ref.shape[0]
    acc = lax.dot_general(y_ref[0], w_ref[0], (((1,), (1,)), ((), ())),
                          preferred_element_type=jnp.float32)
    for ci in range(1, c):
        acc = acc + lax.dot_general(y_ref[ci], w_ref[ci],
                                    (((1,), (1,)), ((), ())),
                                    preferred_element_type=jnp.float32)
    logits = acc + b_ref[...]
    m = jnp.max(logits, axis=-1, keepdims=True)
    shifted = logits - m
    lse = jnp.log(jnp.sum(jnp.exp(shifted), axis=-1, keepdims=True))
    # TODO(synk): output lane width is 10 (masked stores); negligible here.
    o_ref[...] = shifted - lse


# ----------------------------------------------------------------------------
# Tiling helpers
# ----------------------------------------------------------------------------
def _round_up(v, m):
    return (v + m - 1) // m * m


def _vmem_budget():
    """(patch-block byte budget, vmem_limit_bytes) per TPU generation."""
    kind = ""
    try:
        kind = jax.devices()[0].device_kind.lower()
    except Exception:
        pass
    if ("v5" in kind) or ("v6" in kind):
        return 28 << 20, 64 << 20          # 128 MiB physical VMEM: go large
    return 12 << 20, 48 << 20              # v7x (64 MiB/TC) & unknown: safe


def _pick_row_tile(total_rows, bytes_per_row, budget_bytes):
    """Largest 128-multiple divisor of total_rows fitting the VMEM budget,
    leaving >=2 grid steps (so the parallel axis can use both v7x cores)."""
    cap = max(128, (budget_bytes // max(bytes_per_row, 1)) // 128 * 128)
    want_two = total_rows >= 256
    best = 128
    for d in range(128, total_rows + 1, 128):
        if total_rows % d:
            continue
        if d > cap:
            break
        if want_two and d > total_rows // 2:
            break
        best = d
    return best


def _pick_batch_tile(npad, cap=2048):
    """Largest multiple-of-8 divisor of npad (<= cap), >=2 steps if possible."""
    want_two = npad >= 16
    best = 8
    for d in range(8, npad + 1, 8):
        if npad % d:
            continue
        if d > cap:
            break
        if want_two and d > npad // 2:
            break
        best = d
    return best


# ----------------------------------------------------------------------------
# pallas_call wrappers
# ----------------------------------------------------------------------------
def conv_relu_pool(patches, w_cm, bias_col):
    nwin, kp, total = patches.shape
    cout = w_cm.shape[0]
    budget, vmem_limit = _vmem_budget()
    # bf16 patches + bf16 output, double-buffered by the pipeline.
    bytes_per_row = (nwin * kp * 2 + cout * 2) * 2
    tile = _pick_row_tile(total, bytes_per_row, budget)
    return pl.pallas_call(
        conv_relu_pool_kernel,
        out_shape=jax.ShapeDtypeStruct((cout, total), jnp.bfloat16),
        grid=(total // tile,),
        in_specs=[
            pl.BlockSpec((nwin, kp, tile), lambda i: (0, 0, i)),
            pl.BlockSpec((cout, kp), lambda i: (0, 0)),    # resident weight
            pl.BlockSpec((cout, 1), lambda i: (0, 0)),     # resident bias
        ],
        out_specs=pl.BlockSpec((cout, tile), lambda i: (0, i)),
        compiler_params=pltpu.CompilerParams(
            dimension_semantics=("parallel",),
            vmem_limit_bytes=vmem_limit,
        ),
    )(patches, w_cm, bias_col)


def fc_logsoftmax(y2r, wfr, bias_row):
    c, npad, p = y2r.shape
    cls = wfr.shape[1]
    _, vmem_limit = _vmem_budget()
    nt = _pick_batch_tile(npad)
    return pl.pallas_call(
        fc_logsoftmax_kernel,
        out_shape=jax.ShapeDtypeStruct((npad, cls), jnp.float32),
        grid=(npad // nt,),
        in_specs=[
            pl.BlockSpec((c, nt, p), lambda i: (0, i, 0)),
            pl.BlockSpec((c, cls, p), lambda i: (0, 0, 0)),  # resident weight
            pl.BlockSpec((1, cls), lambda i: (0, 0)),        # resident bias
        ],
        out_specs=pl.BlockSpec((nt, cls), lambda i: (i, 0)),
        compiler_params=pltpu.CompilerParams(
            dimension_semantics=("parallel",),
            vmem_limit_bytes=vmem_limit,
        ),
    )(y2r, wfr, bias_row)


# ----------------------------------------------------------------------------
# XLA glue: im2col with fused 2x2-pool window extraction (pure data movement)
# ----------------------------------------------------------------------------
def im2col_pool_patches(y_cnhw, k):
    """im2col for a VALID conv (kernel k) fused with 2x2/2 pool-window
    extraction, from channel-major (C, N, H, W) activations.

    Returns:
      patches: (4, K_pad, T) bf16 — axis 0 indexes the four 2x2-pool window
               positions; K (= C*k*k, ordered (cin, ky, kx) to match PyTorch
               OIHW weight flattening) is padded only to packing granularity
               (16); rows T = N*Hp*Wp are on the lane axis, ordered (n,hp,wp).
      (hp, wp): pooled spatial geometry.
    """
    c, n, h, w = y_cnhw.shape
    ho, wo = h - k + 1, w - k + 1
    hp, wp = ho // 2, wo // 2
    t = n * hp * wp
    phases = []
    for a in range(2):
        for b in range(2):
            feats = []                                    # order (cin, ky, kx)
            for ky in range(k):
                for kx in range(k):
                    s = y_cnhw[:, :, a + ky:a + ky + 2 * hp:2,
                               b + kx:b + kx + 2 * wp:2]  # (C, N, Hp, Wp)
                    feats.append(s.reshape(c, t))
            blk = jnp.stack(feats, axis=1)                # (C, k*k, T)
            phases.append(blk.reshape(c * k * k, t))      # (C*k*k, T)
    patches = jnp.stack(phases, axis=0)                   # (4, K, T)
    k_pad = _round_up(c * k * k, 16)                      # bf16 packing only
    patches = jnp.pad(patches, ((0, 0), (0, k_pad - c * k * k), (0, 0)))
    return patches.astype(jnp.bfloat16), (hp, wp)


# ----------------------------------------------------------------------------
# Full forward pass (Pallas) and pure-JAX reference
# ----------------------------------------------------------------------------
def multilayer_cnn_pallas(x, params):
    w1, b1, w2, b2, wf, bf = params
    n = x.shape[0]
    npad = _round_up(max(n, 1), 8)          # => every row count is a 128-mult
    x_p = jnp.pad(x, ((0, npad - n), (0, 0), (0, 0), (0, 0)))
    x_cm = jnp.transpose(x_p, (1, 0, 2, 3))                # (1, Np, 28, 28)

    # conv1 (1->10, k=5) + ReLU + maxpool(2): 28x28 -> 12x12
    p1, (h1, w1s) = im2col_pool_patches(x_cm, 5)           # (4, 32, T1)
    w1m = jnp.pad(w1.reshape(10, 25),
                  ((0, 0), (0, p1.shape[1] - 25))).astype(jnp.bfloat16)
    y1 = conv_relu_pool(p1, w1m, b1.reshape(10, 1))        # (10, T1) bf16
    y1 = y1.reshape(10, npad, h1, w1s)                     # channel-major

    # conv2 (10->20, k=5) + ReLU + maxpool(2): 12x12 -> 4x4
    p2, (h2, w2s) = im2col_pool_patches(y1, 5)             # (4, 256, T2)
    w2m = jnp.pad(w2.reshape(20, 250),
                  ((0, 0), (0, p2.shape[1] - 250))).astype(jnp.bfloat16)
    y2 = conv_relu_pool(p2, w2m, b2.reshape(20, 1))        # (20, T2) bf16

    # fc + log_softmax, consuming the channel-major conv2 output directly
    # (metadata reshape only; PyTorch flatten order (c, h, w) is handled by
    # re-arranging the fc weight to (cin, class, spatial)).
    y2r = y2.reshape(20, npad, h2 * w2s)                   # (20, Np, 16)
    wfr = jnp.transpose(wf.reshape(10, 20, h2 * w2s),
                        (1, 0, 2)).astype(jnp.bfloat16)    # (20, 10, 16)
    out = fc_logsoftmax(y2r, wfr, bf.reshape(1, 10))       # (Np, 10) f32
    return out[:n]


def multilayer_cnn_ref(x, params):
    w1, b1, w2, b2, wf, bf = params

    def conv(a, w, b):
        y = lax.conv_general_dilated(a, w, (1, 1), 'VALID',
                                     dimension_numbers=('NCHW', 'OIHW', 'NCHW'))
        return y + b[None, :, None, None]

    def pool(a):
        return lax.reduce_window(a, -jnp.inf, lax.max,
                                 (1, 1, 2, 2), (1, 1, 2, 2), 'VALID')

    y = pool(jnp.maximum(conv(x, w1, b1), 0.0))
    y = pool(jnp.maximum(conv(y, w2, b2), 0.0))
    y = y.reshape(y.shape[0], -1)
    return jax.nn.log_softmax(y @ wf.T + bf[None, :], axis=1)


# ----------------------------------------------------------------------------
if __name__ == "__main__":
    key = jax.random.PRNGKey(0)
    kx, k1, k2, k3, k4, k5, k6 = jax.random.split(key, 7)

    # Input: fc expects 320 = 20*4*4 features -> 28x28 inputs (MNIST-sized).
    x = jax.random.normal(kx, (2, 1, 28, 28), dtype=jnp.float32)

    # Deterministic synthetic parameters matching the nn.Module shapes.
    w1 = 0.10 * jax.random.normal(k1, (10, 1, 5, 5), dtype=jnp.float32)
    b1 = 0.10 * jax.random.normal(k2, (10,), dtype=jnp.float32)
    w2 = 0.05 * jax.random.normal(k3, (20, 10, 5, 5), dtype=jnp.float32)
    b2 = 0.05 * jax.random.normal(k4, (20,), dtype=jnp.float32)
    wf = 0.05 * jax.random.normal(k5, (10, 320), dtype=jnp.float32)
    bf = 0.05 * jax.random.normal(k6, (10,), dtype=jnp.float32)
    params = (w1, b1, w2, b2, wf, bf)

    fwd = jax.jit(multilayer_cnn_pallas)
    out = jax.block_until_ready(fwd(x, params))
    ref = jax.block_until_ready(jax.jit(multilayer_cnn_ref)(x, params))

    assert out.shape == (2, 10) and out.dtype == jnp.float32
    np.testing.assert_allclose(np.asarray(out), np.asarray(ref),
                               rtol=1e-2, atol=1e-2)
    print("KERNEL_OK")
</pallas_src>

<mosaic_0001>
module attributes {stable_mosaic.version = 11 : i64} {
  func.func @conv_relu_pool_kernel(%arg0: i32, %arg1: memref<4x32x384xbf16, #tpu.memory_space<vmem>>, %arg2: memref<10x32xbf16, #tpu.memory_space<vmem>>, %arg3: memref<10x1xf32, #tpu.memory_space<vmem>>, %arg4: memref<10x384xbf16, #tpu.memory_space<vmem>>) attributes {dimension_semantics = [#tpu.dimension_semantics<parallel>], iteration_bounds = array<i64: 3>, scalar_prefetch = 0 : i64, scratch_operands = 0 : i64, tpu.core_type = #tpu.core_type<tc>, window_params = [{transform_indices = @transform_0, window_bounds = array<i64: 4, 32, 384>}, {pipeline_mode = #tpu.pipeline_mode<synchronous>, transform_indices = @transform_1, window_bounds = array<i64: 10, 32>}, {pipeline_mode = #tpu.pipeline_mode<synchronous>, transform_indices = @transform_2, window_bounds = array<i64: 10, 1>}, {transform_indices = @transform_3, window_bounds = array<i64: 10, 384>}]} {
    %c0 = arith.constant 0 : index
    %c0_0 = arith.constant 0 : index
    %0 = vector.load %arg2[%c0, %c0_0] : memref<10x32xbf16, #tpu.memory_space<vmem>>, vector<10x32xbf16>
    %c0_1 = arith.constant 0 : index
    %c0_2 = arith.constant 0 : index
    %c0_3 = arith.constant 0 : index
    %1 = vector.load %arg1[%c0_1, %c0_2, %c0_3] : memref<4x32x384xbf16, #tpu.memory_space<vmem>>, vector<1x32x384xbf16>
    %2 = vector.shape_cast %1 : vector<1x32x384xbf16> to vector<32x384xbf16>
    %cst = arith.constant dense<0.000000e+00> : vector<10x384xf32>
    %3 = tpu.matmul %0, %2, %cst {dimension_numbers = #tpu.dot_dimension_numbers<[1], [0], [0], [1], [0, 0, 1, 1], [], []>} : vector<10x32xbf16>, vector<32x384xbf16>, vector<10x384xf32> -> vector<10x384xf32>
    %c1 = arith.constant 1 : index
    %c0_4 = arith.constant 0 : index
    %c0_5 = arith.constant 0 : index
    %4 = vector.load %arg1[%c1, %c0_4, %c0_5] : memref<4x32x384xbf16, #tpu.memory_space<vmem>>, vector<1x32x384xbf16>
    %5 = vector.shape_cast %4 : vector<1x32x384xbf16> to vector<32x384xbf16>
    %cst_6 = arith.constant dense<0.000000e+00> : vector<10x384xf32>
    %6 = tpu.matmul %0, %5, %cst_6 {dimension_numbers = #tpu.dot_dimension_numbers<[1], [0], [0], [1], [0, 0, 1, 1], [], []>} : vector<10x32xbf16>, vector<32x384xbf16>, vector<10x384xf32> -> vector<10x384xf32>
    %7 = arith.maximumf %3, %6 : vector<10x384xf32>
    %c2 = arith.constant 2 : index
    %c0_7 = arith.constant 0 : index
    %c0_8 = arith.constant 0 : index
    %8 = vector.load %arg1[%c2, %c0_7, %c0_8] : memref<4x32x384xbf16, #tpu.memory_space<vmem>>, vector<1x32x384xbf16>
    %9 = vector.shape_cast %8 : vector<1x32x384xbf16> to vector<32x384xbf16>
    %cst_9 = arith.constant dense<0.000000e+00> : vector<10x384xf32>
    %10 = tpu.matmul %0, %9, %cst_9 {dimension_numbers = #tpu.dot_dimension_numbers<[1], [0], [0], [1], [0, 0, 1, 1], [], []>} : vector<10x32xbf16>, vector<32x384xbf16>, vector<10x384xf32> -> vector<10x384xf32>
    %11 = arith.maximumf %7, %10 : vector<10x384xf32>
    %c3 = arith.constant 3 : index
    %c0_10 = arith.constant 0 : index
    %c0_11 = arith.constant 0 : index
    %12 = vector.load %arg1[%c3, %c0_10, %c0_11] : memref<4x32x384xbf16, #tpu.memory_space<vmem>>, vector<1x32x384xbf16>
    %13 = vector.shape_cast %12 : vector<1x32x384xbf16> to vector<32x384xbf16>
    %cst_12 = arith.constant dense<0.000000e+00> : vector<10x384xf32>
    %14 = tpu.matmul %0, %13, %cst_12 {dimension_numbers = #tpu.dot_dimension_numbers<[1], [0], [0], [1], [0, 0, 1, 1], [], []>} : vector<10x32xbf16>, vector<32x384xbf16>, vector<10x384xf32> -> vector<10x384xf32>
    %15 = arith.maximumf %11, %14 : vector<10x384xf32>
    %c0_13 = arith.constant 0 : index
    %c0_14 = arith.constant 0 : index
    %16 = vector.load %arg3[%c0_13, %c0_14] : memref<10x1xf32, #tpu.memory_space<vmem>>, vector<10x1xf32>
    %17 = vector.broadcast %16 : vector<10x1xf32> to vector<10x384xf32>
    %18 = arith.addf %15, %17 : vector<10x384xf32>
    %cst_15 = arith.constant 0.000000e+00 : f32
    %19 = vector.broadcast %cst_15 : f32 to vector<10x384xf32>
    %20 = arith.maximumf %18, %19 : vector<10x384xf32>
    %21 = arith.truncf %20 : vector<10x384xf32> to vector<10x384xbf16>
    %c0_16 = arith.constant 0 : index
    %c0_17 = arith.constant 0 : index
    %22 = vector.load %arg4[%c0_16, %c0_17] : memref<10x384xbf16, #tpu.memory_space<vmem>>, vector<10x384xbf16>
    tpu.vector_store %arg4[%c0_16, %c0_17], %21 {strides = array<i32>} : memref<10x384xbf16, #tpu.memory_space<vmem>>, vector<10x384xbf16>,
    return
  }
  func.func @transform_0(%arg0: i32) -> (i32, i32, i32) {
    %c0_i32 = arith.constant 0 : i32
    %c0_i32_0 = arith.constant 0 : i32
    %c0_i32_1 = arith.constant 0 : i32
    return %c0_i32, %c0_i32_0, %arg0 : i32, i32, i32
  }
  func.func @transform_1(%arg0: i32) -> (i32, i32) {
    %c0_i32 = arith.constant 0 : i32
    %c0_i32_0 = arith.constant 0 : i32
    %c0_i32_1 = arith.constant 0 : i32
    return %c0_i32, %c0_i32_0 : i32, i32
  }
  func.func @transform_2(%arg0: i32) -> (i32, i32) {
    %c0_i32 = arith.constant 0 : i32
    %c0_i32_0 = arith.constant 0 : i32
    %c0_i32_1 = arith.constant 0 : i32
    return %c0_i32, %c0_i32_0 : i32, i32
  }
  func.func @transform_3(%arg0: i32) -> (i32, i32) {
    %c0_i32 = arith.constant 0 : i32
    %c0_i32_0 = arith.constant 0 : i32
    return %c0_i32, %arg0 : i32, i32
  }
}

module attributes {stable_mosaic.version = 11 : i64} {
  func.func @conv_relu_pool_kernel(%arg0: i32, %arg1: memref<4x256x128xbf16, #tpu.memory_space<vmem>>, %arg2: memref<20x256xbf16, #tpu.memory_space<vmem>>, %arg3: memref<20x1xf32, #tpu.memory_space<vmem>>, %arg4: memref<20x128xbf16, #tpu.memory_space<vmem>>) attributes {dimension_semantics = [#tpu.dimension_semantics<parallel>], iteration_bounds = array<i64: 1>, scalar_prefetch = 0 : i64, scratch_operands = 0 : i64, tpu.core_type = #tpu.core_type<tc>, window_params = [{transform_indices = @transform_0, window_bounds = array<i64: 4, 256, 128>}, {pipeline_mode = #tpu.pipeline_mode<synchronous>, transform_indices = @transform_1, window_bounds = array<i64: 20, 256>}, {pipeline_mode = #tpu.pipeline_mode<synchronous>, transform_indices = @transform_2, window_bounds = array<i64: 20, 1>}, {transform_indices = @transform_3, window_bounds = array<i64: 20, 128>}]} {
    %c0 = arith.constant 0 : index
    %c0_0 = arith.constant 0 : index
    %0 = vector.load %arg2[%c0, %c0_0] : memref<20x256xbf16, #tpu.memory_space<vmem>>, vector<20x256xbf16>
    %c0_1 = arith.constant 0 : index
    %c0_2 = arith.constant 0 : index
    %c0_3 = arith.constant 0 : index
    %1 = vector.load %arg1[%c0_1, %c0_2, %c0_3] : memref<4x256x128xbf16, #tpu.memory_space<vmem>>, vector<1x256x128xbf16>
    %2 = vector.shape_cast %1 : vector<1x256x128xbf16> to vector<256x128xbf16>
    %cst = arith.constant dense<0.000000e+00> : vector<20x128xf32>
    %3 = tpu.matmul %0, %2, %cst {dimension_numbers = #tpu.dot_dimension_numbers<[1], [0], [0], [1], [0, 0, 1, 1], [], []>} : vector<20x256xbf16>, vector<256x128xbf16>, vector<20x128xf32> -> vector<20x128xf32>
    %c1 = arith.constant 1 : index
    %c0_4 = arith.constant 0 : index
    %c0_5 = arith.constant 0 : index
    %4 = vector.load %arg1[%c1, %c0_4, %c0_5] : memref<4x256x128xbf16, #tpu.memory_space<vmem>>, vector<1x256x128xbf16>
    %5 = vector.shape_cast %4 : vector<1x256x128xbf16> to vector<256x128xbf16>
    %cst_6 = arith.constant dense<0.000000e+00> : vector<20x128xf32>
    %6 = tpu.matmul %0, %5, %cst_6 {dimension_numbers = #tpu.dot_dimension_numbers<[1], [0], [0], [1], [0, 0, 1, 1], [], []>} : vector<20x256xbf16>, vector<256x128xbf16>, vector<20x128xf32> -> vector<20x128xf32>
    %7 = arith.maximumf %3, %6 : vector<20x128xf32>
    %c2 = arith.constant 2 : index
    %c0_7 = arith.constant 0 : index
    %c0_8 = arith.constant 0 : index
    %8 = vector.load %arg1[%c2, %c0_7, %c0_8] : memref<4x256x128xbf16, #tpu.memory_space<vmem>>, vector<1x256x128xbf16>
    %9 = vector.shape_cast %8 : vector<1x256x128xbf16> to vector<256x128xbf16>
    %cst_9 = arith.constant dense<0.000000e+00> : vector<20x128xf32>
    %10 = tpu.matmul %0, %9, %cst_9 {dimension_numbers = #tpu.dot_dimension_numbers<[1], [0], [0], [1], [0, 0, 1, 1], [], []>} : vector<20x256xbf16>, vector<256x128xbf16>, vector<20x128xf32> -> vector<20x128xf32>
    %11 = arith.maximumf %7, %10 : vector<20x128xf32>
    %c3 = arith.constant 3 : index
    %c0_10 = arith.constant 0 : index
    %c0_11 = arith.constant 0 : index
    %12 = vector.load %arg1[%c3, %c0_10, %c0_11] : memref<4x256x128xbf16, #tpu.memory_space<vmem>>, vector<1x256x128xbf16>
    %13 = vector.shape_cast %12 : vector<1x256x128xbf16> to vector<256x128xbf16>
    %cst_12 = arith.constant dense<0.000000e+00> : vector<20x128xf32>
    %14 = tpu.matmul %0, %13, %cst_12 {dimension_numbers = #tpu.dot_dimension_numbers<[1], [0], [0], [1], [0, 0, 1, 1], [], []>} : vector<20x256xbf16>, vector<256x128xbf16>, vector<20x128xf32> -> vector<20x128xf32>
    %15 = arith.maximumf %11, %14 : vector<20x128xf32>
    %c0_13 = arith.constant 0 : index
    %c0_14 = arith.constant 0 : index
    %16 = vector.load %arg3[%c0_13, %c0_14] : memref<20x1xf32, #tpu.memory_space<vmem>>, vector<20x1xf32>
    %17 = vector.broadcast %16 : vector<20x1xf32> to vector<20x128xf32>
    %18 = arith.addf %15, %17 : vector<20x128xf32>
    %cst_15 = arith.constant 0.000000e+00 : f32
    %19 = vector.broadcast %cst_15 : f32 to vector<20x128xf32>
    %20 = arith.maximumf %18, %19 : vector<20x128xf32>
    %21 = arith.truncf %20 : vector<20x128xf32> to vector<20x128xbf16>
    %c0_16 = arith.constant 0 : index
    %c0_17 = arith.constant 0 : index
    %22 = vector.load %arg4[%c0_16, %c0_17] : memref<20x128xbf16, #tpu.memory_space<vmem>>, vector<20x128xbf16>
    tpu.vector_store %arg4[%c0_16, %c0_17], %21 {strides = array<i32>} : memref<20x128xbf16, #tpu.memory_space<vmem>>, vector<20x128xbf16>,
    return
  }
  func.func @transform_0(%arg0: i32) -> (i32, i32, i32) {
    %c0_i32 = arith.constant 0 : i32
    %c0_i32_0 = arith.constant 0 : i32
    %c0_i32_1 = arith.constant 0 : i32
    return %c0_i32, %c0_i32_0, %arg0 : i32, i32, i32
  }
  func.func @transform_1(%arg0: i32) -> (i32, i32) {
    %c0_i32 = arith.constant 0 : i32
    %c0_i32_0 = arith.constant 0 : i32
    %c0_i32_1 = arith.constant 0 : i32
    return %c0_i32, %c0_i32_0 : i32, i32
  }
  func.func @transform_2(%arg0: i32) -> (i32, i32) {
    %c0_i32 = arith.constant 0 : i32
    %c0_i32_0 = arith.constant 0 : i32
    %c0_i32_1 = arith.constant 0 : i32
    return %c0_i32, %c0_i32_0 : i32, i32
  }
  func.func @transform_3(%arg0: i32) -> (i32, i32) {
    %c0_i32 = arith.constant 0 : i32
    %c0_i32_0 = arith.constant 0 : i32
    return %c0_i32, %arg0 : i32, i32
  }
}

module attributes {stable_mosaic.version = 11 : i64} {
  func.func @fc_logsoftmax_kernel(%arg0: i32, %arg1: memref<20x8x16xbf16, #tpu.memory_space<vmem>>, %arg2: memref<20x10x16xbf16, #tpu.memory_space<vmem>>, %arg3: memref<1x10xf32, #tpu.memory_space<vmem>>, %arg4: memref<8x10xf32, #tpu.memory_space<vmem>>) attributes {dimension_semantics = [#tpu.dimension_semantics<parallel>], iteration_bounds = array<i64: 1>, scalar_prefetch = 0 : i64, scratch_operands = 0 : i64, tpu.core_type = #tpu.core_type<tc>, window_params = [{transform_indices = @transform_0, window_bounds = array<i64: 20, 8, 16>}, {pipeline_mode = #tpu.pipeline_mode<synchronous>, transform_indices = @transform_1, window_bounds = array<i64: 20, 10, 16>}, {pipeline_mode = #tpu.pipeline_mode<synchronous>, transform_indices = @transform_2, window_bounds = array<i64: 1, 10>}, {transform_indices = @transform_3, window_bounds = array<i64: 8, 10>}]} {
    %c0 = arith.constant 0 : index
    %c0_0 = arith.constant 0 : index
    %c0_1 = arith.constant 0 : index
    %0 = vector.load %arg1[%c0, %c0_0, %c0_1] : memref<20x8x16xbf16, #tpu.memory_space<vmem>>, vector<1x8x16xbf16>
    %1 = vector.shape_cast %0 : vector<1x8x16xbf16> to vector<8x16xbf16>
    %c0_2 = arith.constant 0 : index
    %c0_3 = arith.constant 0 : index
    %c0_4 = arith.constant 0 : index
    %2 = vector.load %arg2[%c0_2, %c0_3, %c0_4] : memref<20x10x16xbf16, #tpu.memory_space<vmem>>, vector<1x10x16xbf16>
    %3 = vector.shape_cast %2 : vector<1x10x16xbf16> to vector<10x16xbf16>
    %cst = arith.constant dense<0.000000e+00> : vector<8x10xf32>
    %4 = tpu.matmul %1, %3, %cst {dimension_numbers = #tpu.dot_dimension_numbers<[1], [1], [0], [0], [0, 0, 1, 0], [], []>} : vector<8x16xbf16>, vector<10x16xbf16>, vector<8x10xf32> -> vector<8x10xf32>
    %c1 = arith.constant 1 : index
    %c0_5 = arith.constant 0 : index
    %c0_6 = arith.constant 0 : index
    %5 = vector.load %arg1[%c1, %c0_5, %c0_6] : memref<20x8x16xbf16, #tpu.memory_space<vmem>>, vector<1x8x16xbf16>
    %6 = vector.shape_cast %5 : vector<1x8x16xbf16> to vector<8x16xbf16>
    %c1_7 = arith.constant 1 : index
    %c0_8 = arith.constant 0 : index
    %c0_9 = arith.constant 0 : index
    %7 = vector.load %arg2[%c1_7, %c0_8, %c0_9] : memref<20x10x16xbf16, #tpu.memory_space<vmem>>, vector<1x10x16xbf16>
    %8 = vector.shape_cast %7 : vector<1x10x16xbf16> to vector<10x16xbf16>
    %cst_10 = arith.constant dense<0.000000e+00> : vector<8x10xf32>
    %9 = tpu.matmul %6, %8, %cst_10 {dimension_numbers = #tpu.dot_dimension_numbers<[1], [1], [0], [0], [0, 0, 1, 0], [], []>} : vector<8x16xbf16>, vector<10x16xbf16>, vector<8x10xf32> -> vector<8x10xf32>
    %10 = arith.addf %4, %9 : vector<8x10xf32>
    %c2 = arith.constant 2 : index
    %c0_11 = arith.constant 0 : index
    %c0_12 = arith.constant 0 : index
    %11 = vector.load %arg1[%c2, %c0_11, %c0_12] : memref<20x8x16xbf16, #tpu.memory_space<vmem>>, vector<1x8x16xbf16>
    %12 = vector.shape_cast %11 : vector<1x8x16xbf16> to vector<8x16xbf16>
    %c2_13 = arith.constant 2 : index
    %c0_14 = arith.constant 0 : index
    %c0_15 = arith.constant 0 : index
    %13 = vector.load %arg2[%c2_13, %c0_14, %c0_15] : memref<20x10x16xbf16, #tpu.memory_space<vmem>>, vector<1x10x16xbf16>
    %14 = vector.shape_cast %13 : vector<1x10x16xbf16> to vector<10x16xbf16>
    %cst_16 = arith.constant dense<0.000000e+00> : vector<8x10xf32>
    %15 = tpu.matmul %12, %14, %cst_16 {dimension_numbers = #tpu.dot_dimension_numbers<[1], [1], [0], [0], [0, 0, 1, 0], [], []>} : vector<8x16xbf16>, vector<10x16xbf16>, vector<8x10xf32> -> vector<8x10xf32>
    %16 = arith.addf %10, %15 : vector<8x10xf32>
    %c3 = arith.constant 3 : index
    %c0_17 = arith.constant 0 : index
    %c0_18 = arith.constant 0 : index
    %17 = vector.load %arg1[%c3, %c0_17, %c0_18] : memref<20x8x16xbf16, #tpu.memory_space<vmem>>, vector<1x8x16xbf16>
    %18 = vector.shape_cast %17 : vector<1x8x16xbf16> to vector<8x16xbf16>
    %c3_19 = arith.constant 3 : index
    %c0_20 = arith.constant 0 : index
    %c0_21 = arith.constant 0 : index
    %19 = vector.load %arg2[%c3_19, %c0_20, %c0_21] : memref<20x10x16xbf16, #tpu.memory_space<vmem>>, vector<1x10x16xbf16>
    %20 = vector.shape_cast %19 : vector<1x10x16xbf16> to vector<10x16xbf16>
    %cst_22 = arith.constant dense<0.000000e+00> : vector<8x10xf32>
    %21 = tpu.matmul %18, %20, %cst_22 {dimension_numbers = #tpu.dot_dimension_numbers<[1], [1], [0], [0], [0, 0, 1, 0], [], []>} : vector<8x16xbf16>, vector<10x16xbf16>, vector<8x10xf32> -> vector<8x10xf32>
    %22 = arith.addf %16, %21 : vector<8x10xf32>
    %c4 = arith.constant 4 : index
    %c0_23 = arith.constant 0 : index
    %c0_24 = arith.constant 0 : index
    %23 = vector.load %arg1[%c4, %c0_23, %c0_24] : memref<20x8x16xbf16, #tpu.memory_space<vmem>>, vector<1x8x16xbf16>
    %24 = vector.shape_cast %23 : vector<1x8x16xbf16> to vector<8x16xbf16>
    %c4_25 = arith.constant 4 : index
    %c0_26 = arith.constant 0 : index
    %c0_27 = arith.constant 0 : index
    %25 = vector.load %arg2[%c4_25, %c0_26, %c0_27] : memref<20x10x16xbf16, #tpu.memory_space<vmem>>, vector<1x10x16xbf16>
    %26 = vector.shape_cast %25 : vector<1x10x16xbf16> to vector<10x16xbf16>
    %cst_28 = arith.constant dense<0.000000e+00> : vector<8x10xf32>
    %27 = tpu.matmul %24, %26, %cst_28 {dimension_numbers = #tpu.dot_dimension_numbers<[1], [1], [0], [0], [0, 0, 1, 0], [], []>} : vector<8x16xbf16>, vector<10x16xbf16>, vector<8x10xf32> -> vector<8x10xf32>
    %28 = arith.addf %22, %27 : vector<8x10xf32>
    %c5 = arith.constant 5 : index
    %c0_29 = arith.constant 0 : index
    %c0_30 = arith.constant 0 : index
    %29 = vector.load %arg1[%c5, %c0_29, %c0_30] : memref<20x8x16xbf16, #tpu.memory_space<vmem>>, vector<1x8x16xbf16>
    %30 = vector.shape_cast %29 : vector<1x8x16xbf16> to vector<8x16xbf16>
    %c5_31 = arith.constant 5 : index
    %c0_32 = arith.constant 0 : index
    %c0_33 = arith.constant 0 : index
    %31 = vector.load %arg2[%c5_31, %c0_32, %c0_33] : memref<20x10x16xbf16, #tpu.memory_space<vmem>>, vector<1x10x16xbf16>
    %32 = vector.shape_cast %31 : vector<1x10x16xbf16> to vector<10x16xbf16>
    %cst_34 = arith.constant dense<0.000000e+00> : vector<8x10xf32>
    %33 = tpu.matmul %30, %32, %cst_34 {dimension_numbers = #tpu.dot_dimension_numbers<[1], [1], [0], [0], [0, 0, 1, 0], [], []>} : vector<8x16xbf16>, vector<10x16xbf16>, vector<8x10xf32> -> vector<8x10xf32>
    %34 = arith.addf %28, %33 : vector<8x10xf32>
    %c6 = arith.constant 6 : index
    %c0_35 = arith.constant 0 : index
    %c0_36 = arith.constant 0 : index
    %35 = vector.load %arg1[%c6, %c0_35, %c0_36] : memref<20x8x16xbf16, #tpu.memory_space<vmem>>, vector<1x8x16xbf16>
    %36 = vector.shape_cast %35 : vector<1x8x16xbf16> to vector<8x16xbf16>
    %c6_37 = arith.constant 6 : index
    %c0_38 = arith.constant 0 : index
    %c0_39 = arith.constant 0 : index
    %37 = vector.load %arg2[%c6_37, %c0_38, %c0_39] : memref<20x10x16xbf16, #tpu.memory_space<vmem>>, vector<1x10x16xbf16>
    %38 = vector.shape_cast %37 : vector<1x10x16xbf16> to vector<10x16xbf16>
    %cst_40 = arith.constant dense<0.000000e+00> : vector<8x10xf32>
    %39 = tpu.matmul %36, %38, %cst_40 {dimension_numbers = #tpu.dot_dimension_numbers<[1], [1], [0], [0], [0, 0, 1, 0], [], []>} : vector<8x16xbf16>, vector<10x16xbf16>, vector<8x10xf32> -> vector<8x10xf32>
    %40 = arith.addf %34, %39 : vector<8x10xf32>
    %c7 = arith.constant 7 : index
    %c0_41 = arith.constant 0 : index
    %c0_42 = arith.constant 0 : index
    %41 = vector.load %arg1[%c7, %c0_41, %c0_42] : memref<20x8x16xbf16, #tpu.memory_space<vmem>>, vector<1x8x16xbf16>
    %42 = vector.shape_cast %41 : vector<1x8x16xbf16> to vector<8x16xbf16>
    %c7_43 = arith.constant 7 : index
    %c0_44 = arith.constant 0 : index
    %c0_45 = arith.constant 0 : index
    %43 = vector.load %arg2[%c7_43, %c0_44, %c0_45] : memref<20x10x16xbf16, #tpu.memory_space<vmem>>, vector<1x10x16xbf16>
    %44 = vector.shape_cast %43 : vector<1x10x16xbf16> to vector<10x16xbf16>
    %cst_46 = arith.constant dense<0.000000e+00> : vector<8x10xf32>
    %45 = tpu.matmul %42, %44, %cst_46 {dimension_numbers = #tpu.dot_dimension_numbers<[1], [1], [0], [0], [0, 0, 1, 0], [], []>} : vector<8x16xbf16>, vector<10x16xbf16>, vector<8x10xf32> -> vector<8x10xf32>
    %46 = arith.addf %40, %45 : vector<8x10xf32>
    %c8 = arith.constant 8 : index
    %c0_47 = arith.constant 0 : index
    %c0_48 = arith.constant 0 : index
    %47 = vector.load %arg1[%c8, %c0_47, %c0_48] : memref<20x8x16xbf16, #tpu.memory_space<vmem>>, vector<1x8x16xbf16>
    %48 = vector.shape_cast %47 : vector<1x8x16xbf16> to vector<8x16xbf16>
    %c8_49 = arith.constant 8 : index
    %c0_50 = arith.constant 0 : index
    %c0_51 = arith.constant 0 : index
    %49 = vector.load %arg2[%c8_49, %c0_50, %c0_51] : memref<20x10x16xbf16, #tpu.memory_space<vmem>>, vector<1x10x16xbf16>
    %50 = vector.shape_cast %49 : vector<1x10x16xbf16> to vector<10x16xbf16>
    %cst_52 = arith.constant dense<0.000000e+00> : vector<8x10xf32>
    %51 = tpu.matmul %48, %50, %cst_52 {dimension_numbers = #tpu.dot_dimension_numbers<[1], [1], [0], [0], [0, 0, 1, 0], [], []>} : vector<8x16xbf16>, vector<10x16xbf16>, vector<8x10xf32> -> vector<8x10xf32>
    %52 = arith.addf %46, %51 : vector<8x10xf32>
    %c9 = arith.constant 9 : index
    %c0_53 = arith.constant 0 : index
    %c0_54 = arith.constant 0 : index
    %53 = vector.load %arg1[%c9, %c0_53, %c0_54] : memref<20x8x16xbf16, #tpu.memory_space<vmem>>, vector<1x8x16xbf16>
    %54 = vector.shape_cast %53 : vector<1x8x16xbf16> to vector<8x16xbf16>
    %c9_55 = arith.constant 9 : index
    %c0_56 = arith.constant 0 : index
    %c0_57 = arith.constant 0 : index
    %55 = vector.load %arg2[%c9_55, %c0_56, %c0_57] : memref<20x10x16xbf16, #tpu.memory_space<vmem>>, vector<1x10x16xbf16>
    %56 = vector.shape_cast %55 : vector<1x10x16xbf16> to vector<10x16xbf16>
    %cst_58 = arith.constant dense<0.000000e+00> : vector<8x10xf32>
    %57 = tpu.matmul %54, %56, %cst_58 {dimension_numbers = #tpu.dot_dimension_numbers<[1], [1], [0], [0], [0, 0, 1, 0], [], []>} : vector<8x16xbf16>, vector<10x16xbf16>, vector<8x10xf32> -> vector<8x10xf32>
    %58 = arith.addf %52, %57 : vector<8x10xf32>
    %c10 = arith.constant 10 : index
    %c0_59 = arith.constant 0 : index
    %c0_60 = arith.constant 0 : index
    %59 = vector.load %arg1[%c10, %c0_59, %c0_60] : memref<20x8x16xbf16, #tpu.memory_space<vmem>>, vector<1x8x16xbf16>
    %60 = vector.shape_cast %59 : vector<1x8x16xbf16> to vector<8x16xbf16>
    %c10_61 = arith.constant 10 : index
    %c0_62 = arith.constant 0 : index
    %c0_63 = arith.constant 0 : index
    %61 = vector.load %arg2[%c10_61, %c0_62, %c0_63] : memref<20x10x16xbf16, #tpu.memory_space<vmem>>, vector<1x10x16xbf16>
    %62 = vector.shape_cast %61 : vector<1x10x16xbf16> to vector<10x16xbf16>
    %cst_64 = arith.constant dense<0.000000e+00> : vector<8x10xf32>
    %63 = tpu.matmul %60, %62, %cst_64 {dimension_numbers = #tpu.dot_dimension_numbers<[1], [1], [0], [0], [0, 0, 1, 0], [], []>} : vector<8x16xbf16>, vector<10x16xbf16>, vector<8x10xf32> -> vector<8x10xf32>
    %64 = arith.addf %58, %63 : vector<8x10xf32>
    %c11 = arith.constant 11 : index
    %c0_65 = arith.constant 0 : index
    %c0_66 = arith.constant 0 : index
    %65 = vector.load %arg1[%c11, %c0_65, %c0_66] : memref<20x8x16xbf16, #tpu.memory_space<vmem>>, vector<1x8x16xbf16>
    %66 = vector.shape_cast %65 : vector<1x8x16xbf16> to vector<8x16xbf16>
    %c11_67 = arith.constant 11 : index
    %c0_68 = arith.constant 0 : index
    %c0_69 = arith.constant 0 : index
    %67 = vector.load %arg2[%c11_67, %c0_68, %c0_69] : memref<20x10x16xbf16, #tpu.memory_space<vmem>>, vector<1x10x16xbf16>
    %68 = vector.shape_cast %67 : vector<1x10x16xbf16> to vector<10x16xbf16>
    %cst_70 = arith.constant dense<0.000000e+00> : vector<8x10xf32>
    %69 = tpu.matmul %66, %68, %cst_70 {dimension_numbers = #tpu.dot_dimension_numbers<[1], [1], [0], [0], [0, 0, 1, 0], [], []>} : vector<8x16xbf16>, vector<10x16xbf16>, vector<8x10xf32> -> vector<8x10xf32>
    %70 = arith.addf %64, %69 : vector<8x10xf32>
    %c12 = arith.constant 12 : index
    %c0_71 = arith.constant 0 : index
    %c0_72 = arith.constant 0 : index
    %71 = vector.load %arg1[%c12, %c0_71, %c0_72] : memref<20x8x16xbf16, #tpu.memory_space<vmem>>, vector<1x8x16xbf16>
    %72 = vector.shape_cast %71 : vector<1x8x16xbf16> to vector<8x16xbf16>
    %c12_73 = arith.constant 12 : index
    %c0_74 = arith.constant 0 : index
    %c0_75 = arith.constant 0 : index
    %73 = vector.load %arg2[%c12_73, %c0_74, %c0_75] : memref<20x10x16xbf16, #tpu.memory_space<vmem>>, vector<1x10x16xbf16>
    %74 = vector.shape_cast %73 : vector<1x10x16xbf16> to vector<10x16xbf16>
    %cst_76 = arith.constant dense<0.000000e+00> : vector<8x10xf32>
    %75 = tpu.matmul %72, %74, %cst_76 {dimension_numbers = #tpu.dot_dimension_numbers<[1], [1], [0], [0], [0, 0, 1, 0], [], []>} : vector<8x16xbf16>, vector<10x16xbf16>, vector<8x10xf32> -> vector<8x10xf32>
    %76 = arith.addf %70, %75 : vector<8x10xf32>
    %c13 = arith.constant 13 : index
    %c0_77 = arith.constant 0 : index
    %c0_78 = arith.constant 0 : index
    %77 = vector.load %arg1[%c13, %c0_77, %c0_78] : memref<20x8x16xbf16, #tpu.memory_space<vmem>>, vector<1x8x16xbf16>
    %78 = vector.shape_cast %77 : vector<1x8x16xbf16> to vector<8x16xbf16>
    %c13_79 = arith.constant 13 : index
    %c0_80 = arith.constant 0 : index
    %c0_81 = arith.constant 0 : index
    %79 = vector.load %arg2[%c13_79, %c0_80, %c0_81] : memref<20x10x16xbf16, #tpu.memory_space<vmem>>, vector<1x10x16xbf16>
    %80 = vector.shape_cast %79 : vector<1x10x16xbf16> to vector<10x16xbf16>
    %cst_82 = arith.constant dense<0.000000e+00> : vector<8x10xf32>
    %81 = tpu.matmul %78, %80, %cst_82 {dimension_numbers = #tpu.dot_dimension_numbers<[1], [1], [0], [0], [0, 0, 1, 0], [], []>} : vector<8x16xbf16>, vector<10x16xbf16>, vector<8x10xf32> -> vector<8x10xf32>
    %82 = arith.addf %76, %81 : vector<8x10xf32>
    %c14 = arith.constant 14 : index
    %c0_83 = arith.constant 0 : index
    %c0_84 = arith.constant 0 : index
    %83 = vector.load %arg1[%c14, %c0_83, %c0_84] : memref<20x8x16xbf16, #tpu.memory_space<vmem>>, vector<1x8x16xbf16>
    %84 = vector.shape_cast %83 : vector<1x8x16xbf16> to vector<8x16xbf16>
    %c14_85 = arith.constant 14 : index
    %c0_86 = arith.constant 0 : index
    %c0_87 = arith.constant 0 : index
    %85 = vector.load %arg2[%c14_85, %c0_86, %c0_87] : memref<20x10x16xbf16, #tpu.memory_space<vmem>>, vector<1x10x16xbf16>
    %86 = vector.shape_cast %85 : vector<1x10x16xbf16> to vector<10x16xbf16>
    %cst_88 = arith.constant dense<0.000000e+00> : vector<8x10xf32>
    %87 = tpu.matmul %84, %86, %cst_88 {dimension_numbers = #tpu.dot_dimension_numbers<[1], [1], [0], [0], [0, 0, 1, 0], [], []>} : vector<8x16xbf16>, vector<10x16xbf16>, vector<8x10xf32> -> vector<8x10xf32>
    %88 = arith.addf %82, %87 : vector<8x10xf32>
    %c15 = arith.constant 15 : index
    %c0_89 = arith.constant 0 : index
    %c0_90 = arith.constant 0 : index
    %89 = vector.load %arg1[%c15, %c0_89, %c0_90] : memref<20x8x16xbf16, #tpu.memory_space<vmem>>, vector<1x8x16xbf16>
    %90 = vector.shape_cast %89 : vector<1x8x16xbf16> to vector<8x16xbf16>
    %c15_91 = arith.constant 15 : index
    %c0_92 = arith.constant 0 : index
    %c0_93 = arith.constant 0 : index
    %91 = vector.load %arg2[%c15_91, %c0_92, %c0_93] : memref<20x10x16xbf16, #tpu.memory_space<vmem>>, vector<1x10x16xbf16>
    %92 = vector.shape_cast %91 : vector<1x10x16xbf16> to vector<10x16xbf16>
    %cst_94 = arith.constant dense<0.000000e+00> : vector<8x10xf32>
    %93 = tpu.matmul %90, %92, %cst_94 {dimension_numbers = #tpu.dot_dimension_numbers<[1], [1], [0], [0], [0, 0, 1, 0], [], []>} : vector<8x16xbf16>, vector<10x16xbf16>, vector<8x10xf32> -> vector<8x10xf32>
    %94 = arith.addf %88, %93 : vector<8x10xf32>
    %c16 = arith.constant 16 : index
    %c0_95 = arith.constant 0 : index
    %c0_96 = arith.constant 0 : index
    %95 = vector.load %arg1[%c16, %c0_95, %c0_96] : memref<20x8x16xbf16, #tpu.memory_space<vmem>>, vector<1x8x16xbf16>
    %96 = vector.shape_cast %95 : vector<1x8x16xbf16> to vector<8x16xbf16>
    %c16_97 = arith.constant 16 : index
    %c0_98 = arith.constant 0 : index
    %c0_99 = arith.constant 0 : index
    %97 = vector.load %arg2[%c16_97, %c0_98, %c0_99] : memref<20x10x16xbf16, #tpu.memory_space<vmem>>, vector<1x10x16xbf16>
    %98 = vector.shape_cast %97 : vector<1x10x16xbf16> to vector<10x16xbf16>
    %cst_100 = arith.constant dense<0.000000e+00> : vector<8x10xf32>
    %99 = tpu.matmul %96, %98, %cst_100 {dimension_numbers = #tpu.dot_dimension_numbers<[1], [1], [0], [0], [0, 0, 1, 0], [], []>} : vector<8x16xbf16>, vector<10x16xbf16>, vector<8x10xf32> -> vector<8x10xf32>
    %100 = arith.addf %94, %99 : vector<8x10xf32>
    %c17 = arith.constant 17 : index
    %c0_101 = arith.constant 0 : index
    %c0_102 = arith.constant 0 : index
    %101 = vector.load %arg1[%c17, %c0_101, %c0_102] : memref<20x8x16xbf16, #tpu.memory_space<vmem>>, vector<1x8x16xbf16>
    %102 = vector.shape_cast %101 : vector<1x8x16xbf16> to vector<8x16xbf16>
    %c17_103 = arith.constant 17 : index
    %c0_104 = arith.constant 0 : index
    %c0_105 = arith.constant 0 : index
    %103 = vector.load %arg2[%c17_103, %c0_104, %c0_105] : memref<20x10x16xbf16, #tpu.memory_space<vmem>>, vector<1x10x16xbf16>
    %104 = vector.shape_cast %103 : vector<1x10x16xbf16> to vector<10x16xbf16>
    %cst_106 = arith.constant dense<0.000000e+00> : vector<8x10xf32>
    %105 = tpu.matmul %102, %104, %cst_106 {dimension_numbers = #tpu.dot_dimension_numbers<[1], [1], [0], [0], [0, 0, 1, 0], [], []>} : vector<8x16xbf16>, vector<10x16xbf16>, vector<8x10xf32> -> vector<8x10xf32>
    %106 = arith.addf %100, %105 : vector<8x10xf32>
    %c18 = arith.constant 18 : index
    %c0_107 = arith.constant 0 : index
    %c0_108 = arith.constant 0 : index
    %107 = vector.load %arg1[%c18, %c0_107, %c0_108] : memref<20x8x16xbf16, #tpu.memory_space<vmem>>, vector<1x8x16xbf16>
    %108 = vector.shape_cast %107 : vector<1x8x16xbf16> to vector<8x16xbf16>
    %c18_109 = arith.constant 18 : index
    %c0_110 = arith.constant 0 : index
    %c0_111 = arith.constant 0 : index
    %109 = vector.load %arg2[%c18_109, %c0_110, %c0_111] : memref<20x10x16xbf16, #tpu.memory_space<vmem>>, vector<1x10x16xbf16>
    %110 = vector.shape_cast %109 : vector<1x10x16xbf16> to vector<10x16xbf16>
    %cst_112 = arith.constant dense<0.000000e+00> : vector<8x10xf32>
    %111 = tpu.matmul %108, %110, %cst_112 {dimension_numbers = #tpu.dot_dimension_numbers<[1], [1], [0], [0], [0, 0, 1, 0], [], []>} : vector<8x16xbf16>, vector<10x16xbf16>, vector<8x10xf32> -> vector<8x10xf32>
    %112 = arith.addf %106, %111 : vector<8x10xf32>
    %c19 = arith.constant 19 : index
    %c0_113 = arith.constant 0 : index
    %c0_114 = arith.constant 0 : index
    %113 = vector.load %arg1[%c19, %c0_113, %c0_114] : memref<20x8x16xbf16, #tpu.memory_space<vmem>>, vector<1x8x16xbf16>
    %114 = vector.shape_cast %113 : vector<1x8x16xbf16> to vector<8x16xbf16>
    %c19_115 = arith.constant 19 : index
    %c0_116 = arith.constant 0 : index
    %c0_117 = arith.constant 0 : index
    %115 = vector.load %arg2[%c19_115, %c0_116, %c0_117] : memref<20x10x16xbf16, #tpu.memory_space<vmem>>, vector<1x10x16xbf16>
    %116 = vector.shape_cast %115 : vector<1x10x16xbf16> to vector<10x16xbf16>
    %cst_118 = arith.constant dense<0.000000e+00> : vector<8x10xf32>
    %117 = tpu.matmul %114, %116, %cst_118 {dimension_numbers = #tpu.dot_dimension_numbers<[1], [1], [0], [0], [0, 0, 1, 0], [], []>} : vector<8x16xbf16>, vector<10x16xbf16>, vector<8x10xf32> -> vector<8x10xf32>
    %118 = arith.addf %112, %117 : vector<8x10xf32>
    %c0_119 = arith.constant 0 : index
    %c0_120 = arith.constant 0 : index
    %119 = vector.load %arg3[%c0_119, %c0_120] : memref<1x10xf32, #tpu.memory_space<vmem>>, vector<1x10xf32>
    %120 = vector.broadcast %119 : vector<1x10xf32> to vector<8x10xf32>
    %121 = arith.addf %118, %120 : vector<8x10xf32>
    %cst_121 = arith.constant dense<0xFF800000> : vector<8xf32>
    %122 = vector.multi_reduction <maximumf>, %121, %cst_121 [1] : vector<8x10xf32> to vector<8xf32>
    %123 = vector.shape_cast %122 : vector<8xf32> to vector<8x1xf32>
    %124 = vector.broadcast %123 : vector<8x1xf32> to vector<8x10xf32>
    %125 = arith.subf %121, %124 : vector<8x10xf32>
    %126 = math.exp %125 : vector<8x10xf32>
    %cst_122 = arith.constant dense<0.000000e+00> : vector<8xf32>
    %127 = vector.multi_reduction <add>, %126, %cst_122 [1] : vector<8x10xf32> to vector<8xf32>
    %128 = vector.shape_cast %127 : vector<8xf32> to vector<8x1xf32>
    %129 = math.log %128 : vector<8x1xf32>
    %130 = vector.broadcast %129 : vector<8x1xf32> to vector<8x10xf32>
    %131 = arith.subf %125, %130 : vector<8x10xf32>
    %c0_123 = arith.constant 0 : index
    %c0_124 = arith.constant 0 : index
    %132 = vector.load %arg4[%c0_123, %c0_124] : memref<8x10xf32, #tpu.memory_space<vmem>>, vector<8x10xf32>
    tpu.vector_store %arg4[%c0_123, %c0_124], %131 {strides = array<i32>} : memref<8x10xf32, #tpu.memory_space<vmem>>, vector<8x10xf32>,
    return
  }
  func.func @transform_0(%arg0: i32) -> (i32, i32, i32) {
    %c0_i32 = arith.constant 0 : i32
    %c0_i32_0 = arith.constant 0 : i32
    %c0_i32_1 = arith.constant 0 : i32
    return %c0_i32, %arg0, %c0_i32_0 : i32, i32, i32
  }
  func.func @transform_1(%arg0: i32) -> (i32, i32, i32) {
    %c0_i32 = arith.constant 0 : i32
    %c0_i32_0 = arith.constant 0 : i32
    %c0_i32_1 = arith.constant 0 : i32
    %c0_i32_2 = arith.constant 0 : i32
    return %c0_i32, %c0_i32_0, %c0_i32_1 : i32, i32, i32
  }
  func.func @transform_2(%arg0: i32) -> (i32, i32) {
    %c0_i32 = arith.constant 0 : i32
    %c0_i32_0 = arith.constant 0 : i32
    %c0_i32_1 = arith.constant 0 : i32
    return %c0_i32, %c0_i32_0 : i32, i32
  }
  func.func @transform_3(%arg0: i32) -> (i32, i32) {
    %c0_i32 = arith.constant 0 : i32
    %c0_i32_0 = arith.constant 0 : i32
    return %arg0, %c0_i32 : i32, i32
  }
}

</mosaic_0001>

<llo_original>
// kernel: multilayer_cnn_pallas.3
$region0: #{multilayer_cnn_pallas.3}
  #allocation0 [shape = 'u32[]', space=smem, size = 0x4, offset = 0x4, fixed_abs, tag = 'smem constant byte address 0x4 - core index']
  #allocation1 [shape = 'u32[72,128]{1,0:T(1,128)}', space=vmem, size = 0x9000, scoped, tag = 'internal scratch']
  %s0 = inlined_call_operand.vmem [shape: bf16[4,32,1152], index: 0, kind: input, shape index: {}]
  %s1 = inlined_call_operand.vmem [shape: bf16[10,32], index: 1, kind: input, shape index: {}]
  %s2 = inlined_call_operand.vmem [shape: f32[10,1], index: 2, kind: input, shape index: {}]
  %s3 = inlined_call_operand.vmem [shape: bf16[10,1152], index: 3, kind: output, shape index: {}]
  %s4 = sld [smem:[#allocation0]]
  $region93: #{multilayer_cnn_pallas.3} parent=0
    _
  %s6 = ssub.s32 1, %s4
  %s7 = scalar_select 0, %s6, %s4
  $region1: #{multilayer_cnn_pallas.3} parent=0
    #allocation2 [shape = 'u8[196608]{0}', space=vmem, size = 0x30000, scoped, tag = 'input window, operand 0']
    #allocation3 [shape = 'u8[24576]{0}', space=vmem, size = 0x6000, scoped, tag = 'output window, operand 0']
    loop: start=0, step=1, limit=5
    $region2: #{multilayer_cnn_pallas.3} parent=1 // loop_pre_header
      _
    $region3: #{multilayer_cnn_pallas.3} parent=1 // loop_header
      %s9 = sphi 0, %s13
      %p10 = scmp.ge.s32.totalorder %s9, 5
      %s19 = sphi 0, %s21
      %s22 = sphi 0, %s19
      %s23 = sphi 0, %s22
      %s39 = sphi 0, %s23
      %s43 = sphi 0, %s43
      %s45 = sphi 0, %s43
      %s46 = sphi 0, %s45
      %s60 = sphi 0, %s46
      %s64 = sphi 0, %s64
      %s66 = sphi 0, %s64
      %s67 = sphi 0, %s66
      %s81 = sphi 0, %s67
      %s87 = sphi 0, %s89
      %s90 = sphi 0, %s87
      %s91 = sphi 0, %s90
      %s107 = sphi 0, %s91
    $region4: #{multilayer_cnn_pallas.3} parent=1 // loop_header_branch
      %12 = sbr.rel (%p10) target = $region8
    $region5: #{multilayer_cnn_pallas.3} parent=1 // loop_body
      %s14 = ssub.s32 %s9, 1
      %s15 = ssub.s32 %s9, 2
      %s16 = sadd.s32 %s9, 1
      %s17 = ssub.s32 %s9, %s16
      %p18 = scmp.eq.s32.totalorder %s17, 0
      %s20 = sadd.s32 %s19, 1
      %s21 = scalar_select %p18, %s19, %s20
      %p24 = pneg %p18
      %p25 = scmp.eq.s32.totalorder %s9, 2
      %p26 = por %p24, %p25
      %p27 = scmp.ne.s32.totalorder %s19, %s22
      %p28 = scmp.eq.s32.totalorder %s9, 0
      %p29 = por %p27, %p28
      %p30 = scmp.ne.s32.totalorder %s19, %s22
      %p31 = scmp.eq.s32.totalorder %s14, 2
      %p32 = por %p30, %p31
      %p33 = scmp.ne.s32.totalorder %s22, %s23
      %p34 = scmp.eq.s32.totalorder %s14, 0
      %p35 = por %p33, %p34
      %p36 = scmp.ne.s32.totalorder %s22, %s23
      %p37 = scmp.eq.s32.totalorder %s15, 2
      %p38 = por %p36, %p37
      %p40 = scmp.ne.s32.totalorder %s23, %s39
      %p41 = scmp.eq.s32.totalorder %s15, 0
      %p42 = por %p40, %p41
      %s44 = sadd.s32 %s43, 1
      %p47 = scmp.eq.s32.totalorder %s9, 2
      %p48 = scmp.ne.s32.totalorder %s43, %s45
      %p49 = scmp.eq.s32.totalorder %s9, 0
      %p50 = por %p48, %p49
      %p51 = scmp.ne.s32.totalorder %s43, %s45
      %p52 = scmp.eq.s32.totalorder %s14, 2
      %p53 = por %p51, %p52
      %p54 = scmp.ne.s32.totalorder %s45, %s46
      %p55 = scmp.eq.s32.totalorder %s14, 0
      %p56 = por %p54, %p55
      %p57 = scmp.ne.s32.totalorder %s45, %s46
      %p58 = scmp.eq.s32.totalorder %s15, 2
      %p59 = por %p57, %p58
      %p61 = scmp.ne.s32.totalorder %s46, %s60
      %p62 = scmp.eq.s32.totalorder %s15, 0
      %p63 = por %p61, %p62
      %s65 = sadd.s32 %s64, 1
      %p68 = scmp.eq.s32.totalorder %s9, 2
      %p69 = scmp.ne.s32.totalorder %s64, %s66
      %p70 = scmp.eq.s32.totalorder %s9, 0
      %p71 = por %p69, %p70
      %p72 = scmp.ne.s32.totalorder %s64, %s66
      %p73 = scmp.eq.s32.totalorder %s14, 2
      %p74 = por %p72, %p73
      %p75 = scmp.ne.s32.totalorder %s66, %s67
      %p76 = scmp.eq.s32.totalorder %s14, 0
      %p77 = por %p75, %p76
      %p78 = scmp.ne.s32.totalorder %s66, %s67
      %p79 = scmp.eq.s32.totalorder %s15, 2
      %p80 = por %p78, %p79
      %p82 = scmp.ne.s32.totalorder %s67, %s81
      %p83 = scmp.eq.s32.totalorder %s15, 0
      %p84 = por %p82, %p83
      %s85 = ssub.s32 %s9, %s16
      %p86 = scmp.eq.s32.totalorder %s85, 0
      %s88 = sadd.s32 %s87, 1
      %s89 = scalar_select %p86, %s87, %s88
      %p92 = pneg %p86
      %p93 = scmp.eq.s32.totalorder %s9, 2
      %p94 = por %p92, %p93
      %p95 = scmp.ne.s32.totalorder %s87, %s90
      %p96 = scmp.eq.s32.totalorder %s9, 0
      %p97 = por %p95, %p96
      %p98 = scmp.ne.s32.totalorder %s87, %s90
      %p99 = scmp.eq.s32.totalorder %s14, 2
      %p100 = por %p98, %p99
      %p101 = scmp.ne.s32.totalorder %s90, %s91
      %p102 = scmp.eq.s32.totalorder %s14, 0
      %p103 = por %p101, %p102
      %p104 = scmp.ne.s32.totalorder %s90, %s91
      %p105 = scmp.eq.s32.totalorder %s15, 2
      %p106 = por %p104, %p105
      %p108 = scmp.ne.s32.totalorder %s91, %s107
      %p109 = scmp.eq.s32.totalorder %s15, 0
      %p110 = por %p108, %p109
      %p111 = scmp.le.s32.totalorder 1, %s9
      %p112 = scmp.lt.s32.totalorder %s9, 4
      %p113 = pnand %p111, %p112
      %p114 = pneg %p113
      // Predicated region
      $region9: #{multilayer_cnn_pallas.3} parent=5 // pred_check
        _
      $region10: #{multilayer_cnn_pallas.3} parent=5 // pred_check_branch
        %116 = sbr.rel (%p113) target = $region12
      $region11: #{multilayer_cnn_pallas.3} parent=5 // pred_region
        %s117 = ssub.s32 %s9, 1
        // Predicated region
        $region13: #{multilayer_cnn_pallas.3} parent=11 // pred_check
          %p118 = pneg %p56
        $region14: #{multilayer_cnn_pallas.3} parent=11 // pred_check_branch
          %120 = sbr.rel (%p118) target = $region16
        $region15: #{multilayer_cnn_pallas.3} parent=11 // pred_region
          _
        $region16: #{multilayer_cnn_pallas.3} parent=11 // pred_fallthru
          _
        // Predicated region
        $region17: #{multilayer_cnn_pallas.3} parent=11 // pred_check
          %p121 = pneg %p77
        $region18: #{multilayer_cnn_pallas.3} parent=11 // pred_check_branch
          %123 = sbr.rel (%p121) target = $region20
        $region19: #{multilayer_cnn_pallas.3} parent=11 // pred_region
          _
        $region20: #{multilayer_cnn_pallas.3} parent=11 // pred_fallthru
          _
      $region12: #{multilayer_cnn_pallas.3} parent=5 // pred_fallthru
        _
      %p124 = scmp.lt.s32.totalorder %s9, 3
      // Predicated region
      $region21: #{multilayer_cnn_pallas.3} parent=5 // pred_check
        %p125 = pneg %p124
      $region22: #{multilayer_cnn_pallas.3} parent=5 // pred_check_branch
        %127 = sbr.rel (%p125) target = $region24
      $region23: #{multilayer_cnn_pallas.3} parent=5 // pred_region
        // Predicated region
        $region25: #{multilayer_cnn_pallas.3} parent=23 // pred_check
          %p128 = pneg %p29
        $region26: #{multilayer_cnn_pallas.3} parent=23 // pred_check_branch
          %130 = sbr.rel (%p128) target = $region28
        $region27: #{multilayer_cnn_pallas.3} parent=23 // pred_region
          %s131 = sand.u32 %s19, 1
          %s132 = sand.u32 %s19, 1
          %s133 = smul.addr %s132, 192
          %s134 = scalar_lea.vmem [#allocation2], %s133
          %s135 = smul.u32 3, %s9
          %s136 = smul.addr %s135, 4
          %s137 = scalar_lea.vmem %s0, %s136
          // Predicated region
          $region29: #{multilayer_cnn_pallas.3} parent=27 // pred_check
            _
          $region30: #{multilayer_cnn_pallas.3} parent=27 // pred_check_branch
            %139 = sbr.rel (0) target = $region32
          $region31: #{multilayer_cnn_pallas.3} parent=27 // pred_region
            // Predicated region
            $region33: #{multilayer_cnn_pallas.3} parent=31 // pred_check
              _
            $region34: #{multilayer_cnn_pallas.3} parent=31 // pred_check_branch
              %141 = sbr.rel (0) target = $region36
            $region35: #{multilayer_cnn_pallas.3} parent=31 // pred_region
              %s142 = scalar_lea.vmem %s137, 8
              %s143 = scalar_lea.vmem %s134, 8 [#allocation2]
              loop: start=0, step=1, limit=1
              $region37: #{multilayer_cnn_pallas.3} parent=35 // loop_pre_header
                _
              $region38: #{multilayer_cnn_pallas.3} parent=35 // loop_header
                %s145 = sphi 0, %s149
                %p146 = scmp.ge.s32.totalorder %s145, 1
                %s150 = sphi %s137, %s137
                %s151 = sphi %s134, %s134
              $region39: #{multilayer_cnn_pallas.3} parent=35 // loop_header_branch
                %148 = sbr.rel (%p146) target = $region43
              $region40: #{multilayer_cnn_pallas.3} parent=35 // loop_body
                %v152 = vld [vmem:[%s150] sm:$0xff]
                %153 = vst [vmem:[%s151] sm:$0xff] %v152
                %v154 = vld [vmem:[%s150 + $0x24] sm:$0xff]
                %155 = vst [vmem:[%s151 + $0xc] sm:$0xff] %v154
                %v156 = vld [vmem:[%s150 + $0x48] sm:$0xff]
                %157 = vst [vmem:[%s151 + $0x18] sm:$0xff] %v156
                %v158 = vld [vmem:[%s150 + $0x6c] sm:$0xff]
                %159 = vst [vmem:[%s151 + $0x24] sm:$0xff] %v158
                %v160 = vld [vmem:[%s150 + $0x90] sm:$0xff]
                %161 = vst [vmem:[%s151 + $0x30] sm:$0xff] %v160
                %v162 = vld [vmem:[%s150 + $0xb4] sm:$0xff]
                %163 = vst [vmem:[%s151 + $0x3c] sm:$0xff] %v162
                %v164 = vld [vmem:[%s150 + $0xd8] sm:$0xff]
                %165 = vst [vmem:[%s151 + $0x48] sm:$0xff] %v164
                %v166 = vld [vmem:[%s150 + $0xfc] sm:$0xff]
                %167 = vst [vmem:[%s151 + $0x54] sm:$0xff] %v166
                %v168 = vld [vmem:[%s150 + $0x120] sm:$0xff]
                %169 = vst [vmem:[%s151 + $0x60] sm:$0xff] %v168
                %v170 = vld [vmem:[%s150 + $0x144] sm:$0xff]
                %171 = vst [vmem:[%s151 + $0x6c] sm:$0xff] %v170
                %v172 = vld [vmem:[%s150 + $0x168] sm:$0xff]
                %173 = vst [vmem:[%s151 + $0x78] sm:$0xff] %v172
                %v174 = vld [vmem:[%s150 + $0x18c] sm:$0xff]
                %175 = vst [vmem:[%s151 + $0x84] sm:$0xff] %v174
                %v176 = vld [vmem:[%s150 + $0x1b0] sm:$0xff]
                %177 = vst [vmem:[%s151 + $0x90] sm:$0xff] %v176
                %v178 = vld [vmem:[%s150 + $0x1d4] sm:$0xff]
                %179 = vst [vmem:[%s151 + $0x9c] sm:$0xff] %v178
                %v180 = vld [vmem:[%s150 + $0x1f8] sm:$0xff]
                %181 = vst [vmem:[%s151 + $0xa8] sm:$0xff] %v180
                %v182 = vld [vmem:[%s150 + $0x21c] sm:$0xff]
                %183 = vst [vmem:[%s151 + $0xb4] sm:$0xff] %v182
              $region41: #{multilayer_cnn_pallas.3} parent=35 // loop_footer
                %s149 = sadd.s32 1, %s145
              $region42: #{multilayer_cnn_pallas.3} parent=35 // loop_footer_branch
                %144 = sbr.rel target = $region38
              $region43: #{multilayer_cnn_pallas.3} parent=35 // loop_exit
                _
              %s185 = ssub.s32 16, 1
              loop: start=0, step=1, limit=1
              $region44: #{multilayer_cnn_pallas.3} parent=35 // loop_pre_header
                _
              $region45: #{multilayer_cnn_pallas.3} parent=35 // loop_header
                %s187 = sphi 0, %s191
                %p188 = scmp.ge.s32.totalorder %s187, 1
                %s192 = sphi %s142, %s142
                %s193 = sphi %s143, %s143
              $region46: #{multilayer_cnn_pallas.3} parent=35 // loop_header_branch
                %190 = sbr.rel (%p188) target = $region50
              $region47: #{multilayer_cnn_pallas.3} parent=35 // loop_body
                %v194 = vld [vmem:[%s192] sm:%s185]
                %195 = vst [vmem:[%s193] sm:%s185] %v194
                %v196 = vld [vmem:[%s192 + $0x24] sm:%s185]
                %197 = vst [vmem:[%s193 + $0xc] sm:%s185] %v196
                %v198 = vld [vmem:[%s192 + $0x48] sm:%s185]
                %199 = vst [vmem:[%s193 + $0x18] sm:%s185] %v198
                %v200 = vld [vmem:[%s192 + $0x6c] sm:%s185]
                %201 = vst [vmem:[%s193 + $0x24] sm:%s185] %v200
                %v202 = vld [vmem:[%s192 + $0x90] sm:%s185]
                %203 = vst [vmem:[%s193 + $0x30] sm:%s185] %v202
                %v204 = vld [vmem:[%s192 + $0xb4] sm:%s185]
                %205 = vst [vmem:[%s193 + $0x3c] sm:%s185] %v204
                %v206 = vld [vmem:[%s192 + $0xd8] sm:%s185]
                %207 = vst [vmem:[%s193 + $0x48] sm:%s185] %v206
                %v208 = vld [vmem:[%s192 + $0xfc] sm:%s185]
                %209 = vst [vmem:[%s193 + $0x54] sm:%s185] %v208
                %v210 = vld [vmem:[%s192 + $0x120] sm:%s185]
                %211 = vst [vmem:[%s193 + $0x60] sm:%s185] %v210
                %v212 = vld [vmem:[%s192 + $0x144] sm:%s185]
                %213 = vst [vmem:[%s193 + $0x6c] sm:%s185] %v212
                %v214 = vld [vmem:[%s192 + $0x168] sm:%s185]
                %215 = vst [vmem:[%s193 + $0x78] sm:%s185] %v214
                %v216 = vld [vmem:[%s192 + $0x18c] sm:%s185]
                %217 = vst [vmem:[%s193 + $0x84] sm:%s185] %v216
                %v218 = vld [vmem:[%s192 + $0x1b0] sm:%s185]
                %219 = vst [vmem:[%s193 + $0x90] sm:%s185] %v218
                %v220 = vld [vmem:[%s192 + $0x1d4] sm:%s185]
                %221 = vst [vmem:[%s193 + $0x9c] sm:%s185] %v220
                %v222 = vld [vmem:[%s192 + $0x1f8] sm:%s185]
                %223 = vst [vmem:[%s193 + $0xa8] sm:%s185] %v222
                %v224 = vld [vmem:[%s192 + $0x21c] sm:%s185]
                %225 = vst [vmem:[%s193 + $0xb4] sm:%s185] %v224
              $region48: #{multilayer_cnn_pallas.3} parent=35 // loop_footer
                %s191 = sadd.s32 1, %s187
              $region49: #{multilayer_cnn_pallas.3} parent=35 // loop_footer_branch
                %186 = sbr.rel target = $region45
              $region50: #{multilayer_cnn_pallas.3} parent=35 // loop_exit
                _
            $region36: #{multilayer_cnn_pallas.3} parent=31 // pred_fallthru
              _
          $region32: #{multilayer_cnn_pallas.3} parent=27 // pred_fallthru
            _
          %226 = vnop
        $region28: #{multilayer_cnn_pallas.3} parent=23 // pred_fallthru
          _
      $region24: #{multilayer_cnn_pallas.3} parent=5 // pred_fallthru
        _
      %p227 = scmp.le.s32.totalorder 1, %s9
      %p228 = scmp.lt.s32.totalorder %s9, 4
      %p229 = pnand %p227, %p228
      %p230 = pneg %p229
      // Predicated region
      $region51: #{multilayer_cnn_pallas.3} parent=5 // pred_check
        _
      $region52: #{multilayer_cnn_pallas.3} parent=5 // pred_check_branch
        %232 = sbr.rel (%p229) target = $region54
      $region53: #{multilayer_cnn_pallas.3} parent=5 // pred_region
        %s233 = ssub.s32 %s9, 1
        %s234 = sand.u32 %s22, 1
        %s235 = sand.u32 %s22, 1
        %s236 = smul.addr %s235, 192
        %s237 = scalar_lea.vmem [#allocation2], %s236
        // Predicated region
        $region55: #{multilayer_cnn_pallas.3} parent=53 // pred_check
          %p238 = pneg %p35
        $region56: #{multilayer_cnn_pallas.3} parent=53 // pred_check_branch
          %240 = sbr.rel (%p238) target = $region58
        $region57: #{multilayer_cnn_pallas.3} parent=53 // pred_region
          _
        $region58: #{multilayer_cnn_pallas.3} parent=53 // pred_fallthru
          _
        %s241 = sand.u32 %s22, 1
        %s242 = sand.u32 %s22, 1
        %s243 = smul.addr %s242, 192
        %s244 = scalar_lea.vmem [#allocation2], %s243
        %p245 = pneg %p35
        %p246 = pneg %p32
        %p247 = pneg %p56
        %p248 = pneg %p53
        %p249 = pneg %p77
        %p250 = pneg %p74
        %p251 = pneg %p103
        %p252 = pneg %p100
        %s253 = sand.u32 %s90, 1
        %s254 = sand.u32 %s90, 1
        %s255 = smul.addr %s254, 24
        %s256 = scalar_lea.vmem [#allocation3], %s255
        %s257 = smul.u32 3, %s14
        %s258 = smul.u32 3, %s14
        %v260 = vld [vmem:[%s1] sm:$0xf]
        %v261 = vld [vmem:[%s1 + $0x4] sm:$0x1]
        %v262 = vld [vmem:[%s237] sm:$0xff]
        %v263 = vld [vmem:[%s237 + $0x8] sm:$0xf]
        %v264 = vld [vmem:[%s237 + $0xc] sm:$0xff]
        %v265 = vld [vmem:[%s237 + $0x14] sm:$0xf]
        %v266 = vld [vmem:[%s237 + $0x18] sm:$0xff]
        %v267 = vld [vmem:[%s237 + $0x20] sm:$0xf]
        %v268 = vld [vmem:[%s237 + $0x24] sm:$0xff]
        %v269 = vld [vmem:[%s237 + $0x2c] sm:$0xf]
        %v272 = vunpack.c.l.b16 %v260
        %v273 = vunpack.c.l.b16 %v261
        %v274 = vpack.c.b16 %v273, %v272
        %v283 = vunpack.c.l.b16 %v262
        %v284 = vunpack.c.h.b16 %v262
        %v285 = vunpack.c.l.b16 %v263
        %v286 = vunpack.c.l.b16 %v264
        %v287 = vunpack.c.h.b16 %v264
        %v288 = vunpack.c.l.b16 %v265
        %v289 = vunpack.c.l.b16 %v266
        %v290 = vunpack.c.h.b16 %v266
        %v291 = vunpack.c.l.b16 %v267
        %v292 = vunpack.c.l.b16 %v268
        %v293 = vunpack.c.h.b16 %v268
        %v294 = vunpack.c.l.b16 %v269
        %v295 = vpack.c.b16 %v286, %v283
        %v296 = vpack.c.b16 %v287, %v284
        %v297 = vpack.c.b16 %v288, %v285
        %v298 = vpack.c.b16 %v292, %v289
        %v299 = vpack.c.b16 %v293, %v290
        %v300 = vpack.c.b16 %v294, %v291
        %vm307 = vcmask 261120
        %v309 = vsel %vm307, %v274, 0
        %311 = vmatpush.bf16.msra.mxu0 0
        %312 = vmatpush.bf16.msra.mxu0 0
        %313 = vmatpush.bf16.msra.mxu0 0
        %314 = vmatpush.bf16.msra.mxu0 0
        %315 = vmatpush.bf16.msra.mxu0 0
        %316 = vmatpush.bf16.msra.mxu0 0
        %317 = vmatpush.bf16.msra.mxu0 %v298
        %318 = vmatpush.bf16.msra.mxu0 %v295
        %319 = vmatmul.bf16.gmra.mxu0 %v309
        %v320 = vpop.f32.mrf.mxu0
        %v321 = vadd.f32 0.0, %v320
        %v322 = vpop.f32.mrf.mxu0
        %v323 = vadd.f32 0.0, %v322
        %324 = vdwg.mxu0
        %325 = vmatpush.bf16.msra.mxu0 0
        %326 = vmatpush.bf16.msra.mxu0 0
        %327 = vmatpush.bf16.msra.mxu0 0
        %328 = vmatpush.bf16.msra.mxu0 0
        %329 = vmatpush.bf16.msra.mxu0 0
        %330 = vmatpush.bf16.msra.mxu0 0
        %331 = vmatpush.bf16.msra.mxu0 %v299
        %332 = vmatpush.bf16.msra.mxu0 %v296
        %333 = vmatmul.bf16.gmra.mxu0 %v309
        %v334 = vpop.f32.mrf.mxu0
        %v335 = vadd.f32 0.0, %v334
        %v336 = vpop.f32.mrf.mxu0
        %v337 = vadd.f32 0.0, %v336
        %338 = vdwg.mxu0
        %339 = vmatpush.bf16.msra.mxu0 0
        %340 = vmatpush.bf16.msra.mxu0 0
        %341 = vmatpush.bf16.msra.mxu0 0
        %342 = vmatpush.bf16.msra.mxu0 0
        %343 = vmatpush.bf16.msra.mxu0 0
        %344 = vmatpush.bf16.msra.mxu0 0
        %345 = vmatpush.bf16.msra.mxu0 %v300
        %346 = vmatpush.bf16.msra.mxu0 %v297
        %347 = vmatmul.bf16.gmra.mxu0 %v309
        %v348 = vpop.f32.mrf.mxu0
        %v349 = vadd.f32 0.0, %v348
        %v350 = vpop.f32.mrf.mxu0
        %v351 = vadd.f32 0.0, %v350
        %352 = vdwg.mxu0
        %s353 = scalar_lea.vmem %s237, 48 [#allocation2]
        %v354 = vld [vmem:[%s353] sm:$0xff]
        %v355 = vld [vmem:[%s353 + $0x8] sm:$0xf]
        %v356 = vld [vmem:[%s353 + $0xc] sm:$0xff]
        %v357 = vld [vmem:[%s353 + $0x14] sm:$0xf]
        %v358 = vld [vmem:[%s353 + $0x18] sm:$0xff]
        %v359 = vld [vmem:[%s353 + $0x20] sm:$0xf]
        %v360 = vld [vmem:[%s353 + $0x24] sm:$0xff]
        %v361 = vld [vmem:[%s353 + $0x2c] sm:$0xf]
        %v370 = vunpack.c.l.b16 %v354
        %v371 = vunpack.c.h.b16 %v354
        %v372 = vunpack.c.l.b16 %v355
        %v373 = vunpack.c.l.b16 %v356
        %v374 = vunpack.c.h.b16 %v356
        %v375 = vunpack.c.l.b16 %v357
        %v376 = vunpack.c.l.b16 %v358
        %v377 = vunpack.c.h.b16 %v358
        %v378 = vunpack.c.l.b16 %v359
        %v379 = vunpack.c.l.b16 %v360
        %v380 = vunpack.c.h.b16 %v360
        %v381 = vunpack.c.l.b16 %v361
        %v382 = vpack.c.b16 %v373, %v370
        %v383 = vpack.c.b16 %v374, %v371
        %v384 = vpack.c.b16 %v375, %v372
        %v385 = vpack.c.b16 %v379, %v376
        %v386 = vpack.c.b16 %v380, %v377
        %v387 = vpack.c.b16 %v381, %v378
        %394 = vmatpush.bf16.msra.mxu0 0
        %395 = vmatpush.bf16.msra.mxu0 0
        %396 = vmatpush.bf16.msra.mxu0 0
        %397 = vmatpush.bf16.msra.mxu0 0
        %398 = vmatpush.bf16.msra.mxu0 0
        %399 = vmatpush.bf16.msra.mxu0 0
        %400 = vmatpush.bf16.msra.mxu0 %v385
        %401 = vmatpush.bf16.msra.mxu0 %v382
        %402 = vmatmul.bf16.gmra.mxu0 %v309
        %v403 = vpop.f32.mrf.mxu0
        %v404 = vadd.f32 0.0, %v403
        %v405 = vpop.f32.mrf.mxu0
        %v406 = vadd.f32 0.0, %v405
        %407 = vdwg.mxu0
        %408 = vmatpush.bf16.msra.mxu0 0
        %409 = vmatpush.bf16.msra.mxu0 0
        %410 = vmatpush.bf16.msra.mxu0 0
        %411 = vmatpush.bf16.msra.mxu0 0
        %412 = vmatpush.bf16.msra.mxu0 0
        %413 = vmatpush.bf16.msra.mxu0 0
        %414 = vmatpush.bf16.msra.mxu0 %v386
        %415 = vmatpush.bf16.msra.mxu0 %v383
        %416 = vmatmul.bf16.gmra.mxu0 %v309
        %v417 = vpop.f32.mrf.mxu0
        %v418 = vadd.f32 0.0, %v417
        %v419 = vpop.f32.mrf.mxu0
        %v420 = vadd.f32 0.0, %v419
        %421 = vdwg.mxu0
        %422 = vmatpush.bf16.msra.mxu0 0
        %423 = vmatpush.bf16.msra.mxu0 0
        %424 = vmatpush.bf16.msra.mxu0 0
        %425 = vmatpush.bf16.msra.mxu0 0
        %426 = vmatpush.bf16.msra.mxu0 0
        %427 = vmatpush.bf16.msra.mxu0 0
        %428 = vmatpush.bf16.msra.mxu0 %v387
        %429 = vmatpush.bf16.msra.mxu0 %v384
        %430 = vmatmul.bf16.gmra.mxu0 %v309
        %v431 = vpop.f32.mrf.mxu0
        %v432 = vadd.f32 0.0, %v431
        %v433 = vpop.f32.mrf.mxu0
        %v434 = vadd.f32 0.0, %v433
        %435 = vdwg.mxu0
        %v436 = vmax.f32 %v321, %v404
        %v437 = vmax.f32 %v335, %v418
        %v438 = vmax.f32 %v349, %v432
        %v439 = vmax.f32 %v323, %v406
        %v440 = vmax.f32 %v337, %v420
        %v441 = vmax.f32 %v351, %v434
        %s442 = scalar_lea.vmem %s237, 96 [#allocation2]
        %v443 = vld [vmem:[%s442] sm:$0xff]
        %v444 = vld [vmem:[%s442 + $0x8] sm:$0xf]
        %v445 = vld [vmem:[%s442 + $0xc] sm:$0xff]
        %v446 = vld [vmem:[%s442 + $0x14] sm:$0xf]
        %v447 = vld [vmem:[%s442 + $0x18] sm:$0xff]
        %v448 = vld [vmem:[%s442 + $0x20] sm:$0xf]
        %v449 = vld [vmem:[%s442 + $0x24] sm:$0xff]
        %v450 = vld [vmem:[%s442 + $0x2c] sm:$0xf]
        %v459 = vunpack.c.l.b16 %v443
        %v460 = vunpack.c.h.b16 %v443
        %v461 = vunpack.c.l.b16 %v444
        %v462 = vunpack.c.l.b16 %v445
        %v463 = vunpack.c.h.b16 %v445
        %v464 = vunpack.c.l.b16 %v446
        %v465 = vunpack.c.l.b16 %v447
        %v466 = vunpack.c.h.b16 %v447
        %v467 = vunpack.c.l.b16 %v448
        %v468 = vunpack.c.l.b16 %v449
        %v469 = vunpack.c.h.b16 %v449
        %v470 = vunpack.c.l.b16 %v450
        %v471 = vpack.c.b16 %v462, %v459
        %v472 = vpack.c.b16 %v463, %v460
        %v473 = vpack.c.b16 %v464, %v461
        %v474 = vpack.c.b16 %v468, %v465
        %v475 = vpack.c.b16 %v469, %v466
        %v476 = vpack.c.b16 %v470, %v467
        %483 = vmatpush.bf16.msra.mxu0 0
        %484 = vmatpush.bf16.msra.mxu0 0
        %485 = vmatpush.bf16.msra.mxu0 0
        %486 = vmatpush.bf16.msra.mxu0 0
        %487 = vmatpush.bf16.msra.mxu0 0
        %488 = vmatpush.bf16.msra.mxu0 0
        %489 = vmatpush.bf16.msra.mxu0 %v474
        %490 = vmatpush.bf16.msra.mxu0 %v471
        %491 = vmatmul.bf16.gmra.mxu0 %v309
        %v492 = vpop.f32.mrf.mxu0
        %v493 = vadd.f32 0.0, %v492
        %v494 = vpop.f32.mrf.mxu0
        %v495 = vadd.f32 0.0, %v494
        %496 = vdwg.mxu0
        %497 = vmatpush.bf16.msra.mxu0 0
        %498 = vmatpush.bf16.msra.mxu0 0
        %499 = vmatpush.bf16.msra.mxu0 0
        %500 = vmatpush.bf16.msra.mxu0 0
        %501 = vmatpush.bf16.msra.mxu0 0
        %502 = vmatpush.bf16.msra.mxu0 0
        %503 = vmatpush.bf16.msra.mxu0 %v475
        %504 = vmatpush.bf16.msra.mxu0 %v472
        %505 = vmatmul.bf16.gmra.mxu0 %v309
        %v506 = vpop.f32.mrf.mxu0
        %v507 = vadd.f32 0.0, %v506
        %v508 = vpop.f32.mrf.mxu0
        %v509 = vadd.f32 0.0, %v508
        %510 = vdwg.mxu0
        %511 = vmatpush.bf16.msra.mxu0 0
        %512 = vmatpush.bf16.msra.mxu0 0
        %513 = vmatpush.bf16.msra.mxu0 0
        %514 = vmatpush.bf16.msra.mxu0 0
        %515 = vmatpush.bf16.msra.mxu0 0
        %516 = vmatpush.bf16.msra.mxu0 0
        %517 = vmatpush.bf16.msra.mxu0 %v476
        %518 = vmatpush.bf16.msra.mxu0 %v473
        %519 = vmatmul.bf16.gmra.mxu0 %v309
        %v520 = vpop.f32.mrf.mxu0
        %v521 = vadd.f32 0.0, %v520
        %v522 = vpop.f32.mrf.mxu0
        %v523 = vadd.f32 0.0, %v522
        %524 = vdwg.mxu0
        %v525 = vmax.f32 %v436, %v493
        %v526 = vmax.f32 %v437, %v507
        %v527 = vmax.f32 %v438, %v521
        %v528 = vmax.f32 %v439, %v495
        %v529 = vmax.f32 %v440, %v509
        %v530 = vmax.f32 %v441, %v523
        %s531 = scalar_lea.vmem %s237, 144 [#allocation2]
        %v532 = vld [vmem:[%s531] sm:$0xff]
        %v533 = vld [vmem:[%s531 + $0x8] sm:$0xf]
        %v534 = vld [vmem:[%s531 + $0xc] sm:$0xff]
        %v535 = vld [vmem:[%s531 + $0x14] sm:$0xf]
        %v536 = vld [vmem:[%s531 + $0x18] sm:$0xff]
        %v537 = vld [vmem:[%s531 + $0x20] sm:$0xf]
        %v538 = vld [vmem:[%s531 + $0x24] sm:$0xff]
        %v539 = vld [vmem:[%s531 + $0x2c] sm:$0xf]
        %v548 = vunpack.c.l.b16 %v532
        %v549 = vunpack.c.h.b16 %v532
        %v550 = vunpack.c.l.b16 %v533
        %v551 = vunpack.c.l.b16 %v534
        %v552 = vunpack.c.h.b16 %v534
        %v553 = vunpack.c.l.b16 %v535
        %v554 = vunpack.c.l.b16 %v536
        %v555 = vunpack.c.h.b16 %v536
        %v556 = vunpack.c.l.b16 %v537
        %v557 = vunpack.c.l.b16 %v538
        %v558 = vunpack.c.h.b16 %v538
        %v559 = vunpack.c.l.b16 %v539
        %v560 = vpack.c.b16 %v551, %v548
        %v561 = vpack.c.b16 %v552, %v549
        %v562 = vpack.c.b16 %v553, %v550
        %v563 = vpack.c.b16 %v557, %v554
        %v564 = vpack.c.b16 %v558, %v555
        %v565 = vpack.c.b16 %v559, %v556
        %572 = vmatpush.bf16.msra.mxu0 0
        %573 = vmatpush.bf16.msra.mxu0 0
        %574 = vmatpush.bf16.msra.mxu0 0
        %575 = vmatpush.bf16.msra.mxu0 0
        %576 = vmatpush.bf16.msra.mxu0 0
        %577 = vmatpush.bf16.msra.mxu0 0
        %578 = vmatpush.bf16.msra.mxu0 %v563
        %579 = vmatpush.bf16.msra.mxu0 %v560
        %580 = vmatmul.bf16.gmra.mxu0 %v309
        %v581 = vpop.f32.mrf.mxu0
        %v582 = vadd.f32 0.0, %v581
        %v583 = vpop.f32.mrf.mxu0
        %v584 = vadd.f32 0.0, %v583
        %585 = vdwg.mxu0
        %586 = vmatpush.bf16.msra.mxu0 0
        %587 = vmatpush.bf16.msra.mxu0 0
        %588 = vmatpush.bf16.msra.mxu0 0
        %589 = vmatpush.bf16.msra.mxu0 0
        %590 = vmatpush.bf16.msra.mxu0 0
        %591 = vmatpush.bf16.msra.mxu0 0
        %592 = vmatpush.bf16.msra.mxu0 %v564
        %593 = vmatpush.bf16.msra.mxu0 %v561
        %594 = vmatmul.bf16.gmra.mxu0 %v309
        %v595 = vpop.f32.mrf.mxu0
        %v596 = vadd.f32 0.0, %v595
        %v597 = vpop.f32.mrf.mxu0
        %v598 = vadd.f32 0.0, %v597
        %599 = vdwg.mxu0
        %600 = vmatpush.bf16.msra.mxu0 0
        %601 = vmatpush.bf16.msra.mxu0 0
        %602 = vmatpush.bf16.msra.mxu0 0
        %603 = vmatpush.bf16.msra.mxu0 0
        %604 = vmatpush.bf16.msra.mxu0 0
        %605 = vmatpush.bf16.msra.mxu0 0
        %606 = vmatpush.bf16.msra.mxu0 %v565
        %607 = vmatpush.bf16.msra.mxu0 %v562
        %608 = vmatmul.bf16.gmra.mxu0 %v309
        %v609 = vpop.f32.mrf.mxu0
        %v610 = vadd.f32 0.0, %v609
        %v611 = vpop.f32.mrf.mxu0
        %v612 = vadd.f32 0.0, %v611
        %613 = vdwg.mxu0
        %v614 = vmax.f32 %v525, %v582
        %v615 = vmax.f32 %v526, %v596
        %v616 = vmax.f32 %v527, %v610
        %v617 = vmax.f32 %v528, %v584
        %v618 = vmax.f32 %v529, %v598
        %v619 = vmax.f32 %v530, %v612
        %v620 = vld [vmem:[%s2] sm:$0xff]
        %v621 = vld [vmem:[%s2 + $0x8] sm:$0x3]
        %623 = vset.pattern.permute.xlu0 0
        %624 = vperm.xlu0 %623, %v620
        %v625 = vpop.permute.xlu0 %624
        %628 = vset.pattern.permute.xlu0 0
        %629 = vperm.xlu0 %628, %v621
        %v630 = vpop.permute.xlu0 %629
        %v632 = vadd.f32 %v614, %v625
        %v633 = vadd.f32 %v615, %v625
        %v634 = vadd.f32 %v616, %v625
        %v635 = vadd.f32 %v617, %v630
        %v636 = vadd.f32 %v618, %v630
        %v637 = vadd.f32 %v619, %v630
        %v638 = vmax.f32 %v632, 0.0
        %v639 = vmax.f32 %v633, 0.0
        %v640 = vmax.f32 %v634, 0.0
        %v641 = vmax.f32 %v635, 0.0
        %v642 = vmax.f32 %v636, 0.0
        %v643 = vmax.f32 %v637, 0.0
        %v644 = vpack.c.bf16 %v639, %v638
        %v645 = vpack.c.bf16 %v640, %v640
        %v646 = vpack.c.bf16 %v642, %v641
        %v647 = vpack.c.bf16 %v643, %v643
        %648 = vst [vmem:[%s256] sm:$0xff] %v644
        %649 = vst [vmem:[%s256 + $0x8] sm:$0xf] %v645
        %650 = vst [vmem:[%s256 + $0xc] sm:$0x11] %v646
        %651 = vst [vmem:[%s256 + $0x14] sm:$0x1] %v647
        %s652 = sand.u32 %s90, 1
        %s653 = sand.u32 %s90, 1
        %s654 = smul.addr %s653, 24
        %s655 = scalar_lea.vmem [#allocation3], %s654
        // Predicated region
        $region59: #{multilayer_cnn_pallas.3} parent=53 // pred_check
          %p656 = pneg %p100
        $region60: #{multilayer_cnn_pallas.3} parent=53 // pred_check_branch
          %658 = sbr.rel (%p656) target = $region62
        $region61: #{multilayer_cnn_pallas.3} parent=53 // pred_region
          %s659 = smul.u32 3, %s14
          %s660 = smul.addr %s659, 4
          %s661 = scalar_lea.vmem %s3, %s660
          // Predicated region
          $region63: #{multilayer_cnn_pallas.3} parent=61 // pred_check
            _
          $region64: #{multilayer_cnn_pallas.3} parent=61 // pred_check_branch
            %663 = sbr.rel (0) target = $region66
          $region65: #{multilayer_cnn_pallas.3} parent=61 // pred_region
            // Predicated region
            $region67: #{multilayer_cnn_pallas.3} parent=65 // pred_check
              _
            $region68: #{multilayer_cnn_pallas.3} parent=65 // pred_check_branch
              %665 = sbr.rel (0) target = $region70
            $region69: #{multilayer_cnn_pallas.3} parent=65 // pred_region
              %s666 = scalar_lea.vmem %s655, 8 [#allocation3]
              %s667 = scalar_lea.vmem %s661, 8
              loop: start=0, step=1, limit=1
              $region71: #{multilayer_cnn_pallas.3} parent=69 // loop_pre_header
                _
              $region72: #{multilayer_cnn_pallas.3} parent=69 // loop_header
                %s669 = sphi 0, %s673
                %p670 = scmp.ge.s32.totalorder %s669, 1
                %s674 = sphi %s655, %s655
                %s675 = sphi %s661, %s661
              $region73: #{multilayer_cnn_pallas.3} parent=69 // loop_header_branch
                %672 = sbr.rel (%p670) target = $region77
              $region74: #{multilayer_cnn_pallas.3} parent=69 // loop_body
                %v676 = vld [vmem:[%s674] sm:$0xff]
                %677 = vst [vmem:[%s675] sm:$0xff] %v676
                %v678 = vld [vmem:[%s674 + $0xc] sm:$0xff]
                %679 = vst [vmem:[%s675 + $0x24] sm:$0xff] %v678
              $region75: #{multilayer_cnn_pallas.3} parent=69 // loop_footer
                %s673 = sadd.s32 1, %s669
              $region76: #{multilayer_cnn_pallas.3} parent=69 // loop_footer_branch
                %668 = sbr.rel target = $region72
              $region77: #{multilayer_cnn_pallas.3} parent=69 // loop_exit
                _
              %s681 = ssub.s32 16, 1
              loop: start=0, step=1, limit=1
              $region78: #{multilayer_cnn_pallas.3} parent=69 // loop_pre_header
                _
              $region79: #{multilayer_cnn_pallas.3} parent=69 // loop_header
                %s683 = sphi 0, %s687
                %p684 = scmp.ge.s32.totalorder %s683, 1
                %s688 = sphi %s666, %s666
                %s689 = sphi %s667, %s667
              $region80: #{multilayer_cnn_pallas.3} parent=69 // loop_header_branch
                %686 = sbr.rel (%p684) target = $region84
              $region81: #{multilayer_cnn_pallas.3} parent=69 // loop_body
                %v690 = vld [vmem:[%s688] sm:%s681]
                %691 = vst [vmem:[%s689] sm:%s681] %v690
                %v692 = vld [vmem:[%s688 + $0xc] sm:%s681]
                %693 = vst [vmem:[%s689 + $0x24] sm:%s681] %v692
              $region82: #{multilayer_cnn_pallas.3} parent=69 // loop_footer
                %s687 = sadd.s32 1, %s683
              $region83: #{multilayer_cnn_pallas.3} parent=69 // loop_footer_branch
                %682 = sbr.rel target = $region79
              $region84: #{multilayer_cnn_pallas.3} parent=69 // loop_exit
                _
            $region70: #{multilayer_cnn_pallas.3} parent=65 // pred_fallthru
              _
          $region66: #{multilayer_cnn_pallas.3} parent=61 // pred_fallthru
            _
          %694 = vnop
        $region62: #{multilayer_cnn_pallas.3} parent=53 // pred_fallthru
          _
      $region54: #{multilayer_cnn_pallas.3} parent=5 // pred_fallthru
        _
      %p695 = scmp.le.s32.totalorder 2, %s9
      // Predicated region
      $region85: #{multilayer_cnn_pallas.3} parent=5 // pred_check
        %p696 = pneg %p695
      $region86: #{multilayer_cnn_pallas.3} parent=5 // pred_check_branch
        %698 = sbr.rel (%p696) target = $region88
      $region87: #{multilayer_cnn_pallas.3} parent=5 // pred_region
        %s699 = ssub.s32 %s9, 2
        // Predicated region
        $region89: #{multilayer_cnn_pallas.3} parent=87 // pred_check
          %p700 = pneg %p106
        $region90: #{multilayer_cnn_pallas.3} parent=87 // pred_check_branch
          %702 = sbr.rel (%p700) target = $region92
        $region91: #{multilayer_cnn_pallas.3} parent=87 // pred_region
          %s703 = sand.u32 %s91, 1
          %s704 = sand.u32 %s91, 1
          %s705 = smul.addr %s704, 24
          %s706 = scalar_lea.vmem [#allocation3], %s705
        $region92: #{multilayer_cnn_pallas.3} parent=87 // pred_fallthru
          _
      $region88: #{multilayer_cnn_pallas.3} parent=5 // pred_fallthru
        _
    $region6: #{multilayer_cnn_pallas.3} parent=1 // loop_footer
      %s13 = sadd.s32 1, %s9
    $region7: #{multilayer_cnn_pallas.3} parent=1 // loop_footer_branch
      %8 = sbr.rel target = $region3
    $region8: #{multilayer_cnn_pallas.3} parent=1 // loop_exit
      _

// kernel: multilayer_cnn_pallas.4
$region0: #{multilayer_cnn_pallas.4}
  #allocation0 [shape = 'u32[]', space=smem, size = 0x4, offset = 0x4, fixed_abs, tag = 'smem constant byte address 0x4 - core index']
  #allocation1 [shape = 'u32[72,128]{1,0:T(1,128)}', space=vmem, size = 0x9000, scoped, tag = 'internal scratch']
  %s0 = inlined_call_operand.vmem [shape: bf16[4,256,128], index: 0, kind: input, shape index: {}]
  %s1 = inlined_call_operand.vmem [shape: bf16[20,256], index: 1, kind: input, shape index: {}]
  %s2 = inlined_call_operand.vmem [shape: f32[20,1], index: 2, kind: input, shape index: {}]
  %s3 = inlined_call_operand.vmem [shape: bf16[20,128], index: 3, kind: output, shape index: {}]
  %s4 = sld [smem:[#allocation0]]
  $region22: #{multilayer_cnn_pallas.4} parent=0
    _
  %s6 = ssub.s32 1, %s4
  %s7 = scalar_select 0, %s6, %s4
  // Predicated region
  $region2: #{multilayer_cnn_pallas.4} parent=0 // pred_check
    _
  $region3: #{multilayer_cnn_pallas.4} parent=0 // pred_check_branch
    %9 = sbr.rel (0) target = $region5
  $region4: #{multilayer_cnn_pallas.4} parent=0 // pred_region
    _
  $region5: #{multilayer_cnn_pallas.4} parent=0 // pred_fallthru
    _
  // Predicated region
  $region6: #{multilayer_cnn_pallas.4} parent=0 // pred_check
    _
  $region7: #{multilayer_cnn_pallas.4} parent=0 // pred_check_branch
    %11 = sbr.rel (0) target = $region9
  $region8: #{multilayer_cnn_pallas.4} parent=0 // pred_region
    _
  $region9: #{multilayer_cnn_pallas.4} parent=0 // pred_fallthru
    _
  // Predicated region
  $region10: #{multilayer_cnn_pallas.4} parent=0 // pred_check
    _
  $region11: #{multilayer_cnn_pallas.4} parent=0 // pred_check_branch
    %13 = sbr.rel (0) target = $region13
  $region12: #{multilayer_cnn_pallas.4} parent=0 // pred_region
    _
  $region13: #{multilayer_cnn_pallas.4} parent=0 // pred_fallthru
    _
  %v14 = vld [vmem:[%s1] sm:$0xff]
  %v15 = vld [vmem:[%s1 + $0x8] sm:$0xff]
  %v16 = vld [vmem:[%s1 + $0x10] sm:$0x33]
  %v17 = vld [vmem:[%s0] sm:$0xf]
  %v18 = vld [vmem:[%s0 + $0x4] sm:$0xf]
  %v19 = vld [vmem:[%s0 + $0x8] sm:$0xf]
  %v20 = vld [vmem:[%s0 + $0xc] sm:$0xf]
  %v21 = vld [vmem:[%s0 + $0x10] sm:$0xf]
  %v22 = vld [vmem:[%s0 + $0x14] sm:$0xf]
  %v23 = vld [vmem:[%s0 + $0x18] sm:$0xf]
  %v24 = vld [vmem:[%s0 + $0x1c] sm:$0xf]
  %v25 = vld [vmem:[%s0 + $0x20] sm:$0xf]
  %v26 = vld [vmem:[%s0 + $0x24] sm:$0xf]
  %v27 = vld [vmem:[%s0 + $0x28] sm:$0xf]
  %v28 = vld [vmem:[%s0 + $0x2c] sm:$0xf]
  %v29 = vld [vmem:[%s0 + $0x30] sm:$0xf]
  %v30 = vld [vmem:[%s0 + $0x34] sm:$0xf]
  %v31 = vld [vmem:[%s0 + $0x38] sm:$0xf]
  %v32 = vld [vmem:[%s0 + $0x3c] sm:$0xf]
  %v33 = vld [vmem:[%s0 + $0x40] sm:$0xf]
  %v34 = vld [vmem:[%s0 + $0x44] sm:$0xf]
  %v35 = vld [vmem:[%s0 + $0x48] sm:$0xf]
  %v36 = vld [vmem:[%s0 + $0x4c] sm:$0xf]
  %v37 = vld [vmem:[%s0 + $0x50] sm:$0xf]
  %v38 = vld [vmem:[%s0 + $0x54] sm:$0xf]
  %v39 = vld [vmem:[%s0 + $0x58] sm:$0xf]
  %v40 = vld [vmem:[%s0 + $0x5c] sm:$0xf]
  %v41 = vld [vmem:[%s0 + $0x60] sm:$0xf]
  %v42 = vld [vmem:[%s0 + $0x64] sm:$0xf]
  %v43 = vld [vmem:[%s0 + $0x68] sm:$0xf]
  %v44 = vld [vmem:[%s0 + $0x6c] sm:$0xf]
  %v45 = vld [vmem:[%s0 + $0x70] sm:$0xf]
  %v46 = vld [vmem:[%s0 + $0x74] sm:$0xf]
  %v47 = vld [vmem:[%s0 + $0x78] sm:$0xf]
  %v48 = vld [vmem:[%s0 + $0x7c] sm:$0xf]
  %v52 = vunpack.c.l.b16 %v14
  %v53 = vunpack.c.h.b16 %v14
  %v54 = vunpack.c.l.b16 %v15
  %v55 = vunpack.c.h.b16 %v15
  %v56 = vunpack.c.l.b16 %v16
  %v57 = vunpack.c.h.b16 %v16
  %v58 = vpack.c.b16 %v54, %v52
  %v59 = vpack.c.b16 %v55, %v53
  %v60 = vpack.c.b16 %v56, %v56
  %v61 = vpack.c.b16 %v57, %v57
  %v98 = vunpack.c.l.b16 %v17
  %v99 = vunpack.c.l.b16 %v18
  %v100 = vunpack.c.l.b16 %v19
  %v101 = vunpack.c.l.b16 %v20
  %v102 = vunpack.c.l.b16 %v21
  %v103 = vunpack.c.l.b16 %v22
  %v104 = vunpack.c.l.b16 %v23
  %v105 = vunpack.c.l.b16 %v24
  %v106 = vunpack.c.l.b16 %v25
  %v107 = vunpack.c.l.b16 %v26
  %v108 = vunpack.c.l.b16 %v27
  %v109 = vunpack.c.l.b16 %v28
  %v110 = vunpack.c.l.b16 %v29
  %v111 = vunpack.c.l.b16 %v30
  %v112 = vunpack.c.l.b16 %v31
  %v113 = vunpack.c.l.b16 %v32
  %v114 = vunpack.c.l.b16 %v33
  %v115 = vunpack.c.l.b16 %v34
  %v116 = vunpack.c.l.b16 %v35
  %v117 = vunpack.c.l.b16 %v36
  %v118 = vunpack.c.l.b16 %v37
  %v119 = vunpack.c.l.b16 %v38
  %v120 = vunpack.c.l.b16 %v39
  %v121 = vunpack.c.l.b16 %v40
  %v122 = vunpack.c.l.b16 %v41
  %v123 = vunpack.c.l.b16 %v42
  %v124 = vunpack.c.l.b16 %v43
  %v125 = vunpack.c.l.b16 %v44
  %v126 = vunpack.c.l.b16 %v45
  %v127 = vunpack.c.l.b16 %v46
  %v128 = vunpack.c.l.b16 %v47
  %v129 = vunpack.c.l.b16 %v48
  %v130 = vpack.c.b16 %v99, %v98
  %v131 = vpack.c.b16 %v101, %v100
  %v132 = vpack.c.b16 %v103, %v102
  %v133 = vpack.c.b16 %v105, %v104
  %v134 = vpack.c.b16 %v107, %v106
  %v135 = vpack.c.b16 %v109, %v108
  %v136 = vpack.c.b16 %v111, %v110
  %v137 = vpack.c.b16 %v113, %v112
  %v138 = vpack.c.b16 %v115, %v114
  %v139 = vpack.c.b16 %v117, %v116
  %v140 = vpack.c.b16 %v119, %v118
  %v141 = vpack.c.b16 %v121, %v120
  %v142 = vpack.c.b16 %v123, %v122
  %v143 = vpack.c.b16 %v125, %v124
  %v144 = vpack.c.b16 %v127, %v126
  %v145 = vpack.c.b16 %v129, %v128
  %162 = vmatpush.bf16.msra.mxu0 %v137
  %163 = vmatpush.bf16.msra.mxu0 %v136
  %164 = vmatpush.bf16.msra.mxu0 %v135
  %165 = vmatpush.bf16.msra.mxu0 %v134
  %166 = vmatpush.bf16.msra.mxu0 %v133
  %167 = vmatpush.bf16.msra.mxu0 %v132
  %168 = vmatpush.bf16.msra.mxu0 %v131
  %169 = vmatpush.bf16.msra.mxu0 %v130
  %170 = vmatmul.bf16.gmra.mxu0 %v58
  %v171 = vpop.f32.mrf.mxu0
  %v172 = vadd.f32 0.0, %v171
  %v173 = vpop.f32.mrf.mxu0
  %v174 = vadd.f32 0.0, %v173
  %175 = vmatmul.bf16.gmra.mxu0 %v60
  %v176 = vpop.f32.mrf.mxu0
  %v177 = vadd.f32 0.0, %v176
  %v178 = vpop.f32.mrf.mxu0
  %179 = vdwg.mxu0
  %180 = vmatpush.bf16.msra.mxu0 %v145
  %181 = vmatpush.bf16.msra.mxu0 %v144
  %182 = vmatpush.bf16.msra.mxu0 %v143
  %183 = vmatpush.bf16.msra.mxu0 %v142
  %184 = vmatpush.bf16.msra.mxu0 %v141
  %185 = vmatpush.bf16.msra.mxu0 %v140
  %186 = vmatpush.bf16.msra.mxu0 %v139
  %187 = vmatpush.bf16.msra.mxu0 %v138
  %188 = vmatmul.bf16.gmra.mxu0 %v59
  %v189 = vpop.f32.mrf.mxu0
  %v190 = vadd.f32 %v172, %v189
  %v191 = vpop.f32.mrf.mxu0
  %v192 = vadd.f32 %v174, %v191
  %193 = vmatmul.bf16.gmra.mxu0 %v61
  %v194 = vpop.f32.mrf.mxu0
  %v195 = vadd.f32 %v177, %v194
  %v196 = vpop.f32.mrf.mxu0
  %197 = vdwg.mxu0
  %s198 = scalar_lea.vmem %s0, 128
  %v199 = vld [vmem:[%s198] sm:$0xf]
  %v200 = vld [vmem:[%s198 + $0x4] sm:$0xf]
  %v201 = vld [vmem:[%s198 + $0x8] sm:$0xf]
  %v202 = vld [vmem:[%s198 + $0xc] sm:$0xf]
  %v203 = vld [vmem:[%s198 + $0x10] sm:$0xf]
  %v204 = vld [vmem:[%s198 + $0x14] sm:$0xf]
  %v205 = vld [vmem:[%s198 + $0x18] sm:$0xf]
  %v206 = vld [vmem:[%s198 + $0x1c] sm:$0xf]
  %v207 = vld [vmem:[%s198 + $0x20] sm:$0xf]
  %v208 = vld [vmem:[%s198 + $0x24] sm:$0xf]
  %v209 = vld [vmem:[%s198 + $0x28] sm:$0xf]
  %v210 = vld [vmem:[%s198 + $0x2c] sm:$0xf]
  %v211 = vld [vmem:[%s198 + $0x30] sm:$0xf]
  %v212 = vld [vmem:[%s198 + $0x34] sm:$0xf]
  %v213 = vld [vmem:[%s198 + $0x38] sm:$0xf]
  %v214 = vld [vmem:[%s198 + $0x3c] sm:$0xf]
  %v215 = vld [vmem:[%s198 + $0x40] sm:$0xf]
  %v216 = vld [vmem:[%s198 + $0x44] sm:$0xf]
  %v217 = vld [vmem:[%s198 + $0x48] sm:$0xf]
  %v218 = vld [vmem:[%s198 + $0x4c] sm:$0xf]
  %v219 = vld [vmem:[%s198 + $0x50] sm:$0xf]
  %v220 = vld [vmem:[%s198 + $0x54] sm:$0xf]
  %v221 = vld [vmem:[%s198 + $0x58] sm:$0xf]
  %v222 = vld [vmem:[%s198 + $0x5c] sm:$0xf]
  %v223 = vld [vmem:[%s198 + $0x60] sm:$0xf]
  %v224 = vld [vmem:[%s198 + $0x64] sm:$0xf]
  %v225 = vld [vmem:[%s198 + $0x68] sm:$0xf]
  %v226 = vld [vmem:[%s198 + $0x6c] sm:$0xf]
  %v227 = vld [vmem:[%s198 + $0x70] sm:$0xf]
  %v228 = vld [vmem:[%s198 + $0x74] sm:$0xf]
  %v229 = vld [vmem:[%s198 + $0x78] sm:$0xf]
  %v230 = vld [vmem:[%s198 + $0x7c] sm:$0xf]
  %v263 = vunpack.c.l.b16 %v199
  %v264 = vunpack.c.l.b16 %v200
  %v265 = vunpack.c.l.b16 %v201
  %v266 = vunpack.c.l.b16 %v202
  %v267 = vunpack.c.l.b16 %v203
  %v268 = vunpack.c.l.b16 %v204
  %v269 = vunpack.c.l.b16 %v205
  %v270 = vunpack.c.l.b16 %v206
  %v271 = vunpack.c.l.b16 %v207
  %v272 = vunpack.c.l.b16 %v208
  %v273 = vunpack.c.l.b16 %v209
  %v274 = vunpack.c.l.b16 %v210
  %v275 = vunpack.c.l.b16 %v211
  %v276 = vunpack.c.l.b16 %v212
  %v277 = vunpack.c.l.b16 %v213
  %v278 = vunpack.c.l.b16 %v214
  %v279 = vunpack.c.l.b16 %v215
  %v280 = vunpack.c.l.b16 %v216
  %v281 = vunpack.c.l.b16 %v217
  %v282 = vunpack.c.l.b16 %v218
  %v283 = vunpack.c.l.b16 %v219
  %v284 = vunpack.c.l.b16 %v220
  %v285 = vunpack.c.l.b16 %v221
  %v286 = vunpack.c.l.b16 %v222
  %v287 = vunpack.c.l.b16 %v223
  %v288 = vunpack.c.l.b16 %v224
  %v289 = vunpack.c.l.b16 %v225
  %v290 = vunpack.c.l.b16 %v226
  %v291 = vunpack.c.l.b16 %v227
  %v292 = vunpack.c.l.b16 %v228
  %v293 = vunpack.c.l.b16 %v229
  %v294 = vunpack.c.l.b16 %v230
  %v295 = vpack.c.b16 %v264, %v263
  %v296 = vpack.c.b16 %v266, %v265
  %v297 = vpack.c.b16 %v268, %v267
  %v298 = vpack.c.b16 %v270, %v269
  %v299 = vpack.c.b16 %v272, %v271
  %v300 = vpack.c.b16 %v274, %v273
  %v301 = vpack.c.b16 %v276, %v275
  %v302 = vpack.c.b16 %v278, %v277
  %v303 = vpack.c.b16 %v280, %v279
  %v304 = vpack.c.b16 %v282, %v281
  %v305 = vpack.c.b16 %v284, %v283
  %v306 = vpack.c.b16 %v286, %v285
  %v307 = vpack.c.b16 %v288, %v287
  %v308 = vpack.c.b16 %v290, %v289
  %v309 = vpack.c.b16 %v292, %v291
  %v310 = vpack.c.b16 %v294, %v293
  %327 = vmatpush.bf16.msra.mxu0 %v302
  %328 = vmatpush.bf16.msra.mxu0 %v301
  %329 = vmatpush.bf16.msra.mxu0 %v300
  %330 = vmatpush.bf16.msra.mxu0 %v299
  %331 = vmatpush.bf16.msra.mxu0 %v298
  %332 = vmatpush.bf16.msra.mxu0 %v297
  %333 = vmatpush.bf16.msra.mxu0 %v296
  %334 = vmatpush.bf16.msra.mxu0 %v295
  %335 = vmatmul.bf16.gmra.mxu0 %v58
  %v336 = vpop.f32.mrf.mxu0
  %v337 = vadd.f32 0.0, %v336
  %v338 = vpop.f32.mrf.mxu0
  %v339 = vadd.f32 0.0, %v338
  %340 = vmatmul.bf16.gmra.mxu0 %v60
  %v341 = vpop.f32.mrf.mxu0
  %v342 = vadd.f32 0.0, %v341
  %v343 = vpop.f32.mrf.mxu0
  %344 = vdwg.mxu0
  %345 = vmatpush.bf16.msra.mxu0 %v310
  %346 = vmatpush.bf16.msra.mxu0 %v309
  %347 = vmatpush.bf16.msra.mxu0 %v308
  %348 = vmatpush.bf16.msra.mxu0 %v307
  %349 = vmatpush.bf16.msra.mxu0 %v306
  %350 = vmatpush.bf16.msra.mxu0 %v305
  %351 = vmatpush.bf16.msra.mxu0 %v304
  %352 = vmatpush.bf16.msra.mxu0 %v303
  %353 = vmatmul.bf16.gmra.mxu0 %v59
  %v354 = vpop.f32.mrf.mxu0
  %v355 = vadd.f32 %v337, %v354
  %v356 = vpop.f32.mrf.mxu0
  %v357 = vadd.f32 %v339, %v356
  %358 = vmatmul.bf16.gmra.mxu0 %v61
  %v359 = vpop.f32.mrf.mxu0
  %v360 = vadd.f32 %v342, %v359
  %v361 = vpop.f32.mrf.mxu0
  %362 = vdwg.mxu0
  %v363 = vmax.f32 %v190, %v355
  %v364 = vmax.f32 %v192, %v357
  %v365 = vmax.f32 %v195, %v360
  %s366 = scalar_lea.vmem %s0, 256
  %v367 = vld [vmem:[%s366] sm:$0xf]
  %v368 = vld [vmem:[%s366 + $0x4] sm:$0xf]
  %v369 = vld [vmem:[%s366 + $0x8] sm:$0xf]
  %v370 = vld [vmem:[%s366 + $0xc] sm:$0xf]
  %v371 = vld [vmem:[%s366 + $0x10] sm:$0xf]
  %v372 = vld [vmem:[%s366 + $0x14] sm:$0xf]
  %v373 = vld [vmem:[%s366 + $0x18] sm:$0xf]
  %v374 = vld [vmem:[%s366 + $0x1c] sm:$0xf]
  %v375 = vld [vmem:[%s366 + $0x20] sm:$0xf]
  %v376 = vld [vmem:[%s366 + $0x24] sm:$0xf]
  %v377 = vld [vmem:[%s366 + $0x28] sm:$0xf]
  %v378 = vld [vmem:[%s366 + $0x2c] sm:$0xf]
  %v379 = vld [vmem:[%s366 + $0x30] sm:$0xf]
  %v380 = vld [vmem:[%s366 + $0x34] sm:$0xf]
  %v381 = vld [vmem:[%s366 + $0x38] sm:$0xf]
  %v382 = vld [vmem:[%s366 + $0x3c] sm:$0xf]
  %v383 = vld [vmem:[%s366 + $0x40] sm:$0xf]
  %v384 = vld [vmem:[%s366 + $0x44] sm:$0xf]
  %v385 = vld [vmem:[%s366 + $0x48] sm:$0xf]
  %v386 = vld [vmem:[%s366 + $0x4c] sm:$0xf]
  %v387 = vld [vmem:[%s366 + $0x50] sm:$0xf]
  %v388 = vld [vmem:[%s366 + $0x54] sm:$0xf]
  %v389 = vld [vmem:[%s366 + $0x58] sm:$0xf]
  %v390 = vld [vmem:[%s366 + $0x5c] sm:$0xf]
  %v391 = vld [vmem:[%s366 + $0x60] sm:$0xf]
  %v392 = vld [vmem:[%s366 + $0x64] sm:$0xf]
  %v393 = vld [vmem:[%s366 + $0x68] sm:$0xf]
  %v394 = vld [vmem:[%s366 + $0x6c] sm:$0xf]
  %v395 = vld [vmem:[%s366 + $0x70] sm:$0xf]
  %v396 = vld [vmem:[%s366 + $0x74] sm:$0xf]
  %v397 = vld [vmem:[%s366 + $0x78] sm:$0xf]
  %v398 = vld [vmem:[%s366 + $0x7c] sm:$0xf]
  %v431 = vunpack.c.l.b16 %v367
  %v432 = vunpack.c.l.b16 %v368
  %v433 = vunpack.c.l.b16 %v369
  %v434 = vunpack.c.l.b16 %v370
  %v435 = vunpack.c.l.b16 %v371
  %v436 = vunpack.c.l.b16 %v372
  %v437 = vunpack.c.l.b16 %v373
  %v438 = vunpack.c.l.b16 %v374
  %v439 = vunpack.c.l.b16 %v375
  %v440 = vunpack.c.l.b16 %v376
  %v441 = vunpack.c.l.b16 %v377
  %v442 = vunpack.c.l.b16 %v378
  %v443 = vunpack.c.l.b16 %v379
  %v444 = vunpack.c.l.b16 %v380
  %v445 = vunpack.c.l.b16 %v381
  %v446 = vunpack.c.l.b16 %v382
  %v447 = vunpack.c.l.b16 %v383
  %v448 = vunpack.c.l.b16 %v384
  %v449 = vunpack.c.l.b16 %v385
  %v450 = vunpack.c.l.b16 %v386
  %v451 = vunpack.c.l.b16 %v387
  %v452 = vunpack.c.l.b16 %v388
  %v453 = vunpack.c.l.b16 %v389
  %v454 = vunpack.c.l.b16 %v390
  %v455 = vunpack.c.l.b16 %v391
  %v456 = vunpack.c.l.b16 %v392
  %v457 = vunpack.c.l.b16 %v393
  %v458 = vunpack.c.l.b16 %v394
  %v459 = vunpack.c.l.b16 %v395
  %v460 = vunpack.c.l.b16 %v396
  %v461 = vunpack.c.l.b16 %v397
  %v462 = vunpack.c.l.b16 %v398
  %v463 = vpack.c.b16 %v432, %v431
  %v464 = vpack.c.b16 %v434, %v433
  %v465 = vpack.c.b16 %v436, %v435
  %v466 = vpack.c.b16 %v438, %v437
  %v467 = vpack.c.b16 %v440, %v439
  %v468 = vpack.c.b16 %v442, %v441
  %v469 = vpack.c.b16 %v444, %v443
  %v470 = vpack.c.b16 %v446, %v445
  %v471 = vpack.c.b16 %v448, %v447
  %v472 = vpack.c.b16 %v450, %v449
  %v473 = vpack.c.b16 %v452, %v451
  %v474 = vpack.c.b16 %v454, %v453
  %v475 = vpack.c.b16 %v456, %v455
  %v476 = vpack.c.b16 %v458, %v457
  %v477 = vpack.c.b16 %v460, %v459
  %v478 = vpack.c.b16 %v462, %v461
  %495 = vmatpush.bf16.msra.mxu0 %v470
  %496 = vmatpush.bf16.msra.mxu0 %v469
  %497 = vmatpush.bf16.msra.mxu0 %v468
  %498 = vmatpush.bf16.msra.mxu0 %v467
  %499 = vmatpush.bf16.msra.mxu0 %v466
  %500 = vmatpush.bf16.msra.mxu0 %v465
  %501 = vmatpush.bf16.msra.mxu0 %v464
  %502 = vmatpush.bf16.msra.mxu0 %v463
  %503 = vmatmul.bf16.gmra.mxu0 %v58
  %v504 = vpop.f32.mrf.mxu0
  %v505 = vadd.f32 0.0, %v504
  %v506 = vpop.f32.mrf.mxu0
  %v507 = vadd.f32 0.0, %v506
  %508 = vmatmul.bf16.gmra.mxu0 %v60
  %v509 = vpop.f32.mrf.mxu0
  %v510 = vadd.f32 0.0, %v509
  %v511 = vpop.f32.mrf.mxu0
  %512 = vdwg.mxu0
  %513 = vmatpush.bf16.msra.mxu0 %v478
  %514 = vmatpush.bf16.msra.mxu0 %v477
  %515 = vmatpush.bf16.msra.mxu0 %v476
  %516 = vmatpush.bf16.msra.mxu0 %v475
  %517 = vmatpush.bf16.msra.mxu0 %v474
  %518 = vmatpush.bf16.msra.mxu0 %v473
  %519 = vmatpush.bf16.msra.mxu0 %v472
  %520 = vmatpush.bf16.msra.mxu0 %v471
  %521 = vmatmul.bf16.gmra.mxu0 %v59
  %v522 = vpop.f32.mrf.mxu0
  %v523 = vadd.f32 %v505, %v522
  %v524 = vpop.f32.mrf.mxu0
  %v525 = vadd.f32 %v507, %v524
  %526 = vmatmul.bf16.gmra.mxu0 %v61
  %v527 = vpop.f32.mrf.mxu0
  %v528 = vadd.f32 %v510, %v527
  %v529 = vpop.f32.mrf.mxu0
  %530 = vdwg.mxu0
  %v531 = vmax.f32 %v363, %v523
  %v532 = vmax.f32 %v364, %v525
  %v533 = vmax.f32 %v365, %v528
  %s534 = scalar_lea.vmem %s0, 384
  %v535 = vld [vmem:[%s534] sm:$0xf]
  %v536 = vld [vmem:[%s534 + $0x4] sm:$0xf]
  %v537 = vld [vmem:[%s534 + $0x8] sm:$0xf]
  %v538 = vld [vmem:[%s534 + $0xc] sm:$0xf]
  %v539 = vld [vmem:[%s534 + $0x10] sm:$0xf]
  %v540 = vld [vmem:[%s534 + $0x14] sm:$0xf]
  %v541 = vld [vmem:[%s534 + $0x18] sm:$0xf]
  %v542 = vld [vmem:[%s534 + $0x1c] sm:$0xf]
  %v543 = vld [vmem:[%s534 + $0x20] sm:$0xf]
  %v544 = vld [vmem:[%s534 + $0x24] sm:$0xf]
  %v545 = vld [vmem:[%s534 + $0x28] sm:$0xf]
  %v546 = vld [vmem:[%s534 + $0x2c] sm:$0xf]
  %v547 = vld [vmem:[%s534 + $0x30] sm:$0xf]
  %v548 = vld [vmem:[%s534 + $0x34] sm:$0xf]
  %v549 = vld [vmem:[%s534 + $0x38] sm:$0xf]
  %v550 = vld [vmem:[%s534 + $0x3c] sm:$0xf]
  %v551 = vld [vmem:[%s534 + $0x40] sm:$0xf]
  %v552 = vld [vmem:[%s534 + $0x44] sm:$0xf]
  %v553 = vld [vmem:[%s534 + $0x48] sm:$0xf]
  %v554 = vld [vmem:[%s534 + $0x4c] sm:$0xf]
  %v555 = vld [vmem:[%s534 + $0x50] sm:$0xf]
  %v556 = vld [vmem:[%s534 + $0x54] sm:$0xf]
  %v557 = vld [vmem:[%s534 + $0x58] sm:$0xf]
  %v558 = vld [vmem:[%s534 + $0x5c] sm:$0xf]
  %v559 = vld [vmem:[%s534 + $0x60] sm:$0xf]
  %v560 = vld [vmem:[%s534 + $0x64] sm:$0xf]
  %v561 = vld [vmem:[%s534 + $0x68] sm:$0xf]
  %v562 = vld [vmem:[%s534 + $0x6c] sm:$0xf]
  %v563 = vld [vmem:[%s534 + $0x70] sm:$0xf]
  %v564 = vld [vmem:[%s534 + $0x74] sm:$0xf]
  %v565 = vld [vmem:[%s534 + $0x78] sm:$0xf]
  %v566 = vld [vmem:[%s534 + $0x7c] sm:$0xf]
  %v599 = vunpack.c.l.b16 %v535
  %v600 = vunpack.c.l.b16 %v536
  %v601 = vunpack.c.l.b16 %v537
  %v602 = vunpack.c.l.b16 %v538
  %v603 = vunpack.c.l.b16 %v539
  %v604 = vunpack.c.l.b16 %v540
  %v605 = vunpack.c.l.b16 %v541
  %v606 = vunpack.c.l.b16 %v542
  %v607 = vunpack.c.l.b16 %v543
  %v608 = vunpack.c.l.b16 %v544
  %v609 = vunpack.c.l.b16 %v545
  %v610 = vunpack.c.l.b16 %v546
  %v611 = vunpack.c.l.b16 %v547
  %v612 = vunpack.c.l.b16 %v548
  %v613 = vunpack.c.l.b16 %v549
  %v614 = vunpack.c.l.b16 %v550
  %v615 = vunpack.c.l.b16 %v551
  %v616 = vunpack.c.l.b16 %v552
  %v617 = vunpack.c.l.b16 %v553
  %v618 = vunpack.c.l.b16 %v554
  %v619 = vunpack.c.l.b16 %v555
  %v620 = vunpack.c.l.b16 %v556
  %v621 = vunpack.c.l.b16 %v557
  %v622 = vunpack.c.l.b16 %v558
  %v623 = vunpack.c.l.b16 %v559
  %v624 = vunpack.c.l.b16 %v560
  %v625 = vunpack.c.l.b16 %v561
  %v626 = vunpack.c.l.b16 %v562
  %v627 = vunpack.c.l.b16 %v563
  %v628 = vunpack.c.l.b16 %v564
  %v629 = vunpack.c.l.b16 %v565
  %v630 = vunpack.c.l.b16 %v566
  %v631 = vpack.c.b16 %v600, %v599
  %v632 = vpack.c.b16 %v602, %v601
  %v633 = vpack.c.b16 %v604, %v603
  %v634 = vpack.c.b16 %v606, %v605
  %v635 = vpack.c.b16 %v608, %v607
  %v636 = vpack.c.b16 %v610, %v609
  %v637 = vpack.c.b16 %v612, %v611
  %v638 = vpack.c.b16 %v614, %v613
  %v639 = vpack.c.b16 %v616, %v615
  %v640 = vpack.c.b16 %v618, %v617
  %v641 = vpack.c.b16 %v620, %v619
  %v642 = vpack.c.b16 %v622, %v621
  %v643 = vpack.c.b16 %v624, %v623
  %v644 = vpack.c.b16 %v626, %v625
  %v645 = vpack.c.b16 %v628, %v627
  %v646 = vpack.c.b16 %v630, %v629
  %663 = vmatpush.bf16.msra.mxu0 %v638
  %664 = vmatpush.bf16.msra.mxu0 %v637
  %665 = vmatpush.bf16.msra.mxu0 %v636
  %666 = vmatpush.bf16.msra.mxu0 %v635
  %667 = vmatpush.bf16.msra.mxu0 %v634
  %668 = vmatpush.bf16.msra.mxu0 %v633
  %669 = vmatpush.bf16.msra.mxu0 %v632
  %670 = vmatpush.bf16.msra.mxu0 %v631
  %671 = vmatmul.bf16.gmra.mxu0 %v58
  %v672 = vpop.f32.mrf.mxu0
  %v673 = vadd.f32 0.0, %v672
  %v674 = vpop.f32.mrf.mxu0
  %v675 = vadd.f32 0.0, %v674
  %676 = vmatmul.bf16.gmra.mxu0 %v60
  %v677 = vpop.f32.mrf.mxu0
  %v678 = vadd.f32 0.0, %v677
  %v679 = vpop.f32.mrf.mxu0
  %680 = vdwg.mxu0
  %681 = vmatpush.bf16.msra.mxu0 %v646
  %682 = vmatpush.bf16.msra.mxu0 %v645
  %683 = vmatpush.bf16.msra.mxu0 %v644
  %684 = vmatpush.bf16.msra.mxu0 %v643
  %685 = vmatpush.bf16.msra.mxu0 %v642
  %686 = vmatpush.bf16.msra.mxu0 %v641
  %687 = vmatpush.bf16.msra.mxu0 %v640
  %688 = vmatpush.bf16.msra.mxu0 %v639
  %689 = vmatmul.bf16.gmra.mxu0 %v59
  %v690 = vpop.f32.mrf.mxu0
  %v691 = vadd.f32 %v673, %v690
  %v692 = vpop.f32.mrf.mxu0
  %v693 = vadd.f32 %v675, %v692
  %694 = vmatmul.bf16.gmra.mxu0 %v61
  %v695 = vpop.f32.mrf.mxu0
  %v696 = vadd.f32 %v678, %v695
  %v697 = vpop.f32.mrf.mxu0
  %698 = vdwg.mxu0
  %v699 = vmax.f32 %v531, %v691
  %v700 = vmax.f32 %v532, %v693
  %v701 = vmax.f32 %v533, %v696
  %v702 = vld [vmem:[%s2] sm:$0xff]
  %v703 = vld [vmem:[%s2 + $0x8] sm:$0xff]
  %v704 = vld [vmem:[%s2 + $0x10] sm:$0xf]
  %706 = vset.pattern.permute.xlu0 0
  %707 = vperm.xlu0 %706, %v702
  %v708 = vpop.permute.xlu0 %707
  %711 = vset.pattern.permute.xlu0 0
  %712 = vperm.xlu0 %711, %v703
  %v713 = vpop.permute.xlu0 %712
  %716 = vset.pattern.permute.xlu0 0
  %717 = vperm.xlu0 %716, %v704
  %v718 = vpop.permute.xlu0 %717
  %v720 = vadd.f32 %v699, %v708
  %v721 = vadd.f32 %v700, %v713
  %v722 = vadd.f32 %v701, %v718
  %v723 = vmax.f32 %v720, 0.0
  %v724 = vmax.f32 %v721, 0.0
  %v725 = vmax.f32 %v722, 0.0
  %v726 = vpack.c.bf16 %v723, %v723
  %v727 = vpack.c.bf16 %v724, %v724
  %v728 = vpack.c.bf16 %v725, %v725
  %729 = vst [vmem:[%s3] sm:$0xf] %v726
  %730 = vst [vmem:[%s3 + $0x4] sm:$0xf] %v727
  %731 = vst [vmem:[%s3 + $0x8] sm:$0x3] %v728
  // Predicated region
  $region14: #{multilayer_cnn_pallas.4} parent=0 // pred_check
    _
  $region15: #{multilayer_cnn_pallas.4} parent=0 // pred_check_branch
    %733 = sbr.rel (0) target = $region17
  $region16: #{multilayer_cnn_pallas.4} parent=0 // pred_region
    _
  $region17: #{multilayer_cnn_pallas.4} parent=0 // pred_fallthru
    _
  // Predicated region
  $region18: #{multilayer_cnn_pallas.4} parent=0 // pred_check
    _
  $region19: #{multilayer_cnn_pallas.4} parent=0 // pred_check_branch
    %735 = sbr.rel (0) target = $region21
  $region20: #{multilayer_cnn_pallas.4} parent=0 // pred_region
    _
  $region21: #{multilayer_cnn_pallas.4} parent=0 // pred_fallthru
    _

// kernel: multilayer_cnn_pallas.5
$region0: #{multilayer_cnn_pallas.5}
  #allocation0 [shape = 'u32[]', space=smem, size = 0x4, offset = 0x4, fixed_abs, tag = 'smem constant byte address 0x4 - core index']
  #allocation1 [shape = 'u32[72,128]{1,0:T(1,128)}', space=vmem, size = 0x9000, scoped, tag = 'internal scratch']
  %s0 = inlined_call_operand.vmem [shape: bf16[20,8,16], index: 0, kind: input, shape index: {}]
  %s1 = inlined_call_operand.vmem [shape: bf16[20,10,16], index: 1, kind: input, shape index: {}]
  %s2 = inlined_call_operand.vmem [shape: f32[1,10], index: 2, kind: input, shape index: {}]
  %s3 = inlined_call_operand.vmem [shape: f32[8,10], index: 3, kind: output, shape index: {}]
  %s4 = sld [smem:[#allocation0]]
  $region22: #{multilayer_cnn_pallas.5} parent=0
    _
  %s6 = ssub.s32 1, %s4
  %s7 = scalar_select 0, %s6, %s4
  // Predicated region
  $region2: #{multilayer_cnn_pallas.5} parent=0 // pred_check
    _
  $region3: #{multilayer_cnn_pallas.5} parent=0 // pred_check_branch
    %9 = sbr.rel (0) target = $region5
  $region4: #{multilayer_cnn_pallas.5} parent=0 // pred_region
    _
  $region5: #{multilayer_cnn_pallas.5} parent=0 // pred_fallthru
    _
  // Predicated region
  $region6: #{multilayer_cnn_pallas.5} parent=0 // pred_check
    _
  $region7: #{multilayer_cnn_pallas.5} parent=0 // pred_check_branch
    %11 = sbr.rel (0) target = $region9
  $region8: #{multilayer_cnn_pallas.5} parent=0 // pred_region
    _
  $region9: #{multilayer_cnn_pallas.5} parent=0 // pred_fallthru
    _
  // Predicated region
  $region10: #{multilayer_cnn_pallas.5} parent=0 // pred_check
    _
  $region11: #{multilayer_cnn_pallas.5} parent=0 // pred_check_branch
    %13 = sbr.rel (0) target = $region13
  $region12: #{multilayer_cnn_pallas.5} parent=0 // pred_region
    _
  $region13: #{multilayer_cnn_pallas.5} parent=0 // pred_fallthru
    _
  %v15 = vld [vmem:[%s0] sm:$0xf]
  %v16 = vld [vmem:[%s1] sm:$0xf]
  %v17 = vld [vmem:[%s1 + $0x4] sm:$0x1]
  %s18 = scalar_lea.vmem %s0, 4
  %v19 = vld [vmem:[%s18] sm:$0xf]
  %s20 = scalar_lea.vmem %s1, 8
  %v21 = vld [vmem:[%s20] sm:$0xf]
  %v22 = vld [vmem:[%s20 + $0x4] sm:$0x1]
  %v25 = vunpack.c.l.b16 %v21
  %v26 = vunpack.c.l.b16 %v22
  %v27 = vpack.c.b16 %v26, %v25
  %vm28 = vcmask 130048
  %v30 = vsel %vm28, %v19, 0
  %v33 = vsel %vm28, %v27, 0
  %35 = vmatpush.bf16.xpose.msra.mxu0 0
  %36 = vmatpush.bf16.xpose.msra.mxu0 0
  %37 = vmatpush.bf16.xpose.msra.mxu0 0
  %38 = vmatpush.bf16.xpose.msra.mxu0 0
  %39 = vmatpush.bf16.xpose.msra.mxu0 0
  %40 = vmatpush.bf16.xpose.msra.mxu0 0
  %41 = vmatpush.bf16.xpose.msra.mxu0 0
  %42 = vmatpush.bf16.xpose.msra.mxu0 %v33
  %43 = vmatmul.bf16.gmra.mxu0 %v30
  %v44 = vpop.f32.mrf.mxu0
  %v45 = vadd.f32 0.0, %v44
  %v46 = vpop.f32.mrf.mxu0
  %47 = vdwg.mxu0
  %v50 = vunpack.c.l.b16 %v16
  %v51 = vunpack.c.l.b16 %v17
  %v52 = vpack.c.b16 %v51, %v50
  %v54 = vsel %vm28, %v15, 0
  %v57 = vsel %vm28, %v52, 0
  %59 = vmatpush.bf16.xpose.msra.mxu0 0
  %60 = vmatpush.bf16.xpose.msra.mxu0 0
  %61 = vmatpush.bf16.xpose.msra.mxu0 0
  %62 = vmatpush.bf16.xpose.msra.mxu0 0
  %63 = vmatpush.bf16.xpose.msra.mxu0 0
  %64 = vmatpush.bf16.xpose.msra.mxu0 0
  %65 = vmatpush.bf16.xpose.msra.mxu0 0
  %66 = vmatpush.bf16.xpose.msra.mxu0 %v57
  %67 = vmatmul.bf16.gmra.mxu0 %v54
  %v68 = vpop.f32.mrf.mxu0
  %v69 = vadd.f32 %v45, %v68
  %v70 = vpop.f32.mrf.mxu0
  %71 = vdwg.mxu0
  %s72 = scalar_lea.vmem %s0, 8
  %v73 = vld [vmem:[%s72] sm:$0xf]
  %s74 = scalar_lea.vmem %s1, 16
  %v75 = vld [vmem:[%s74] sm:$0xf]
  %v76 = vld [vmem:[%s74 + $0x4] sm:$0x1]
  %v79 = vunpack.c.l.b16 %v75
  %v80 = vunpack.c.l.b16 %v76
  %v81 = vpack.c.b16 %v80, %v79
  %v83 = vsel %vm28, %v73, 0
  %v86 = vsel %vm28, %v81, 0
  %88 = vmatpush.bf16.xpose.msra.mxu0 0
  %89 = vmatpush.bf16.xpose.msra.mxu0 0
  %90 = vmatpush.bf16.xpose.msra.mxu0 0
  %91 = vmatpush.bf16.xpose.msra.mxu0 0
  %92 = vmatpush.bf16.xpose.msra.mxu0 0
  %93 = vmatpush.bf16.xpose.msra.mxu0 0
  %94 = vmatpush.bf16.xpose.msra.mxu0 0
  %95 = vmatpush.bf16.xpose.msra.mxu0 %v86
  %96 = vmatmul.bf16.gmra.mxu0 %v83
  %v97 = vpop.f32.mrf.mxu0
  %v98 = vadd.f32 0.0, %v97
  %v99 = vpop.f32.mrf.mxu0
  %100 = vdwg.mxu0
  %v101 = vadd.f32 %v69, %v98
  %s102 = scalar_lea.vmem %s0, 12
  %v103 = vld [vmem:[%s102] sm:$0xf]
  %s104 = scalar_lea.vmem %s1, 24
  %v105 = vld [vmem:[%s104] sm:$0xf]
  %v106 = vld [vmem:[%s104 + $0x4] sm:$0x1]
  %v109 = vunpack.c.l.b16 %v105
  %v110 = vunpack.c.l.b16 %v106
  %v111 = vpack.c.b16 %v110, %v109
  %v113 = vsel %vm28, %v103, 0
  %v116 = vsel %vm28, %v111, 0
  %118 = vmatpush.bf16.xpose.msra.mxu0 0
  %119 = vmatpush.bf16.xpose.msra.mxu0 0
  %120 = vmatpush.bf16.xpose.msra.mxu0 0
  %121 = vmatpush.bf16.xpose.msra.mxu0 0
  %122 = vmatpush.bf16.xpose.msra.mxu0 0
  %123 = vmatpush.bf16.xpose.msra.mxu0 0
  %124 = vmatpush.bf16.xpose.msra.mxu0 0
  %125 = vmatpush.bf16.xpose.msra.mxu0 %v116
  %126 = vmatmul.bf16.gmra.mxu0 %v113
  %v127 = vpop.f32.mrf.mxu0
  %v128 = vadd.f32 0.0, %v127
  %v129 = vpop.f32.mrf.mxu0
  %130 = vdwg.mxu0
  %v131 = vadd.f32 %v101, %v128
  %s132 = scalar_lea.vmem %s0, 16
  %v133 = vld [vmem:[%s132] sm:$0xf]
  %s134 = scalar_lea.vmem %s1, 32
  %v135 = vld [vmem:[%s134] sm:$0xf]
  %v136 = vld [vmem:[%s134 + $0x4] sm:$0x1]
  %v139 = vunpack.c.l.b16 %v135
  %v140 = vunpack.c.l.b16 %v136
  %v141 = vpack.c.b16 %v140, %v139
  %v143 = vsel %vm28, %v133, 0
  %v146 = vsel %vm28, %v141, 0
  %148 = vmatpush.bf16.xpose.msra.mxu0 0
  %149 = vmatpush.bf16.xpose.msra.mxu0 0
  %150 = vmatpush.bf16.xpose.msra.mxu0 0
  %151 = vmatpush.bf16.xpose.msra.mxu0 0
  %152 = vmatpush.bf16.xpose.msra.mxu0 0
  %153 = vmatpush.bf16.xpose.msra.mxu0 0
  %154 = vmatpush.bf16.xpose.msra.mxu0 0
  %155 = vmatpush.bf16.xpose.msra.mxu0 %v146
  %156 = vmatmul.bf16.gmra.mxu0 %v143
  %v157 = vpop.f32.mrf.mxu0
  %v158 = vadd.f32 0.0, %v157
  %v159 = vpop.f32.mrf.mxu0
  %160 = vdwg.mxu0
  %v161 = vadd.f32 %v131, %v158
  %s162 = scalar_lea.vmem %s0, 20
  %v163 = vld [vmem:[%s162] sm:$0xf]
  %s164 = scalar_lea.vmem %s1, 40
  %v165 = vld [vmem:[%s164] sm:$0xf]
  %v166 = vld [vmem:[%s164 + $0x4] sm:$0x1]
  %v169 = vunpack.c.l.b16 %v165
  %v170 = vunpack.c.l.b16 %v166
  %v171 = vpack.c.b16 %v170, %v169
  %v173 = vsel %vm28, %v163, 0
  %v176 = vsel %vm28, %v171, 0
  %178 = vmatpush.bf16.xpose.msra.mxu0 0
  %179 = vmatpush.bf16.xpose.msra.mxu0 0
  %180 = vmatpush.bf16.xpose.msra.mxu0 0
  %181 = vmatpush.bf16.xpose.msra.mxu0 0
  %182 = vmatpush.bf16.xpose.msra.mxu0 0
  %183 = vmatpush.bf16.xpose.msra.mxu0 0
  %184 = vmatpush.bf16.xpose.msra.mxu0 0
  %185 = vmatpush.bf16.xpose.msra.mxu0 %v176
  %186 = vmatmul.bf16.gmra.mxu0 %v173
  %v187 = vpop.f32.mrf.mxu0
  %v188 = vadd.f32 0.0, %v187
  %v189 = vpop.f32.mrf.mxu0
  %190 = vdwg.mxu0
  %v191 = vadd.f32 %v161, %v188
  %s192 = scalar_lea.vmem %s0, 24
  %v193 = vld [vmem:[%s192] sm:$0xf]
  %s194 = scalar_lea.vmem %s1, 48
  %v195 = vld [vmem:[%s194] sm:$0xf]
  %v196 = vld [vmem:[%s194 + $0x4] sm:$0x1]
  %v199 = vunpack.c.l.b16 %v195
  %v200 = vunpack.c.l.b16 %v196
  %v201 = vpack.c.b16 %v200, %v199
  %v203 = vsel %vm28, %v193, 0
  %v206 = vsel %vm28, %v201, 0
  %208 = vmatpush.bf16.xpose.msra.mxu0 0
  %209 = vmatpush.bf16.xpose.msra.mxu0 0
  %210 = vmatpush.bf16.xpose.msra.mxu0 0
  %211 = vmatpush.bf16.xpose.msra.mxu0 0
  %212 = vmatpush.bf16.xpose.msra.mxu0 0
  %213 = vmatpush.bf16.xpose.msra.mxu0 0
  %214 = vmatpush.bf16.xpose.msra.mxu0 0
  %215 = vmatpush.bf16.xpose.msra.mxu0 %v206
  %216 = vmatmul.bf16.gmra.mxu0 %v203
  %v217 = vpop.f32.mrf.mxu0
  %v218 = vadd.f32 0.0, %v217
  %v219 = vpop.f32.mrf.mxu0
  %220 = vdwg.mxu0
  %v221 = vadd.f32 %v191, %v218
  %s222 = scalar_lea.vmem %s0, 28
  %v223 = vld [vmem:[%s222] sm:$0xf]
  %s224 = scalar_lea.vmem %s1, 56
  %v225 = vld [vmem:[%s224] sm:$0xf]
  %v226 = vld [vmem:[%s224 + $0x4] sm:$0x1]
  %v229 = vunpack.c.l.b16 %v225
  %v230 = vunpack.c.l.b16 %v226
  %v231 = vpack.c.b16 %v230, %v229
  %v233 = vsel %vm28, %v223, 0
  %v236 = vsel %vm28, %v231, 0
  %238 = vmatpush.bf16.xpose.msra.mxu0 0
  %239 = vmatpush.bf16.xpose.msra.mxu0 0
  %240 = vmatpush.bf16.xpose.msra.mxu0 0
  %241 = vmatpush.bf16.xpose.msra.mxu0 0
  %242 = vmatpush.bf16.xpose.msra.mxu0 0
  %243 = vmatpush.bf16.xpose.msra.mxu0 0
  %244 = vmatpush.bf16.xpose.msra.mxu0 0
  %245 = vmatpush.bf16.xpose.msra.mxu0 %v236
  %246 = vmatmul.bf16.gmra.mxu0 %v233
  %v247 = vpop.f32.mrf.mxu0
  %v248 = vadd.f32 0.0, %v247
  %v249 = vpop.f32.mrf.mxu0
  %250 = vdwg.mxu0
  %v251 = vadd.f32 %v221, %v248
  %s252 = scalar_lea.vmem %s0, 32
  %v253 = vld [vmem:[%s252] sm:$0xf]
  %s254 = scalar_lea.vmem %s1, 64
  %v255 = vld [vmem:[%s254] sm:$0xf]
  %v256 = vld [vmem:[%s254 + $0x4] sm:$0x1]
  %v259 = vunpack.c.l.b16 %v255
  %v260 = vunpack.c.l.b16 %v256
  %v261 = vpack.c.b16 %v260, %v259
  %v263 = vsel %vm28, %v253, 0
  %v266 = vsel %vm28, %v261, 0
  %268 = vmatpush.bf16.xpose.msra.mxu0 0
  %269 = vmatpush.bf16.xpose.msra.mxu0 0
  %270 = vmatpush.bf16.xpose.msra.mxu0 0
  %271 = vmatpush.bf16.xpose.msra.mxu0 0
  %272 = vmatpush.bf16.xpose.msra.mxu0 0
  %273 = vmatpush.bf16.xpose.msra.mxu0 0
  %274 = vmatpush.bf16.xpose.msra.mxu0 0
  %275 = vmatpush.bf16.xpose.msra.mxu0 %v266
  %276 = vmatmul.bf16.gmra.mxu0 %v263
  %v277 = vpop.f32.mrf.mxu0
  %v278 = vadd.f32 0.0, %v277
  %v279 = vpop.f32.mrf.mxu0
  %280 = vdwg.mxu0
  %v281 = vadd.f32 %v251, %v278
  %s282 = scalar_lea.vmem %s0, 36
  %v283 = vld [vmem:[%s282] sm:$0xf]
  %s284 = scalar_lea.vmem %s1, 72
  %v285 = vld [vmem:[%s284] sm:$0xf]
  %v286 = vld [vmem:[%s284 + $0x4] sm:$0x1]
  %v289 = vunpack.c.l.b16 %v285
  %v290 = vunpack.c.l.b16 %v286
  %v291 = vpack.c.b16 %v290, %v289
  %v293 = vsel %vm28, %v283, 0
  %v296 = vsel %vm28, %v291, 0
  %298 = vmatpush.bf16.xpose.msra.mxu0 0
  %299 = vmatpush.bf16.xpose.msra.mxu0 0
  %300 = vmatpush.bf16.xpose.msra.mxu0 0
  %301 = vmatpush.bf16.xpose.msra.mxu0 0
  %302 = vmatpush.bf16.xpose.msra.mxu0 0
  %303 = vmatpush.bf16.xpose.msra.mxu0 0
  %304 = vmatpush.bf16.xpose.msra.mxu0 0
  %305 = vmatpush.bf16.xpose.msra.mxu0 %v296
  %306 = vmatmul.bf16.gmra.mxu0 %v293
  %v307 = vpop.f32.mrf.mxu0
  %v308 = vadd.f32 0.0, %v307
  %v309 = vpop.f32.mrf.mxu0
  %310 = vdwg.mxu0
  %v311 = vadd.f32 %v281, %v308
  %s312 = scalar_lea.vmem %s0, 40
  %v313 = vld [vmem:[%s312] sm:$0xf]
  %s314 = scalar_lea.vmem %s1, 80
  %v315 = vld [vmem:[%s314] sm:$0xf]
  %v316 = vld [vmem:[%s314 + $0x4] sm:$0x1]
  %v319 = vunpack.c.l.b16 %v315
  %v320 = vunpack.c.l.b16 %v316
  %v321 = vpack.c.b16 %v320, %v319
  %v323 = vsel %vm28, %v313, 0
  %v326 = vsel %vm28, %v321, 0
  %328 = vmatpush.bf16.xpose.msra.mxu0 0
  %329 = vmatpush.bf16.xpose.msra.mxu0 0
  %330 = vmatpush.bf16.xpose.msra.mxu0 0
  %331 = vmatpush.bf16.xpose.msra.mxu0 0
  %332 = vmatpush.bf16.xpose.msra.mxu0 0
  %333 = vmatpush.bf16.xpose.msra.mxu0 0
  %334 = vmatpush.bf16.xpose.msra.mxu0 0
  %335 = vmatpush.bf16.xpose.msra.mxu0 %v326
  %336 = vmatmul.bf16.gmra.mxu0 %v323
  %v337 = vpop.f32.mrf.mxu0
  %v338 = vadd.f32 0.0, %v337
  %v339 = vpop.f32.mrf.mxu0
  %340 = vdwg.mxu0
  %v341 = vadd.f32 %v311, %v338
  %s342 = scalar_lea.vmem %s0, 44
  %v343 = vld [vmem:[%s342] sm:$0xf]
  %s344 = scalar_lea.vmem %s1, 88
  %v345 = vld [vmem:[%s344] sm:$0xf]
  %v346 = vld [vmem:[%s344 + $0x4] sm:$0x1]
  %v349 = vunpack.c.l.b16 %v345
  %v350 = vunpack.c.l.b16 %v346
  %v351 = vpack.c.b16 %v350, %v349
  %v353 = vsel %vm28, %v343, 0
  %v356 = vsel %vm28, %v351, 0
  %358 = vmatpush.bf16.xpose.msra.mxu0 0
  %359 = vmatpush.bf16.xpose.msra.mxu0 0
  %360 = vmatpush.bf16.xpose.msra.mxu0 0
  %361 = vmatpush.bf16.xpose.msra.mxu0 0
  %362 = vmatpush.bf16.xpose.msra.mxu0 0
  %363 = vmatpush.bf16.xpose.msra.mxu0 0
  %364 = vmatpush.bf16.xpose.msra.mxu0 0
  %365 = vmatpush.bf16.xpose.msra.mxu0 %v356
  %366 = vmatmul.bf16.gmra.mxu0 %v353
  %v367 = vpop.f32.mrf.mxu0
  %v368 = vadd.f32 0.0, %v367
  %v369 = vpop.f32.mrf.mxu0
  %370 = vdwg.mxu0
  %v371 = vadd.f32 %v341, %v368
  %s372 = scalar_lea.vmem %s0, 48
  %v373 = vld [vmem:[%s372] sm:$0xf]
  %s374 = scalar_lea.vmem %s1, 96
  %v375 = vld [vmem:[%s374] sm:$0xf]
  %v376 = vld [vmem:[%s374 + $0x4] sm:$0x1]
  %v379 = vunpack.c.l.b16 %v375
  %v380 = vunpack.c.l.b16 %v376
  %v381 = vpack.c.b16 %v380, %v379
  %v383 = vsel %vm28, %v373, 0
  %v386 = vsel %vm28, %v381, 0
  %388 = vmatpush.bf16.xpose.msra.mxu0 0
  %389 = vmatpush.bf16.xpose.msra.mxu0 0
  %390 = vmatpush.bf16.xpose.msra.mxu0 0
  %391 = vmatpush.bf16.xpose.msra.mxu0 0
  %392 = vmatpush.bf16.xpose.msra.mxu0 0
  %393 = vmatpush.bf16.xpose.msra.mxu0 0
  %394 = vmatpush.bf16.xpose.msra.mxu0 0
  %395 = vmatpush.bf16.xpose.msra.mxu0 %v386
  %396 = vmatmul.bf16.gmra.mxu0 %v383
  %v397 = vpop.f32.mrf.mxu0
  %v398 = vadd.f32 0.0, %v397
  %v399 = vpop.f32.mrf.mxu0
  %400 = vdwg.mxu0
  %v401 = vadd.f32 %v371, %v398
  %s402 = scalar_lea.vmem %s0, 52
  %v403 = vld [vmem:[%s402] sm:$0xf]
  %s404 = scalar_lea.vmem %s1, 104
  %v405 = vld [vmem:[%s404] sm:$0xf]
  %v406 = vld [vmem:[%s404 + $0x4] sm:$0x1]
  %v409 = vunpack.c.l.b16 %v405
  %v410 = vunpack.c.l.b16 %v406
  %v411 = vpack.c.b16 %v410, %v409
  %v413 = vsel %vm28, %v403, 0
  %v416 = vsel %vm28, %v411, 0
  %418 = vmatpush.bf16.xpose.msra.mxu0 0
  %419 = vmatpush.bf16.xpose.msra.mxu0 0
  %420 = vmatpush.bf16.xpose.msra.mxu0 0
  %421 = vmatpush.bf16.xpose.msra.mxu0 0
  %422 = vmatpush.bf16.xpose.msra.mxu0 0
  %423 = vmatpush.bf16.xpose.msra.mxu0 0
  %424 = vmatpush.bf16.xpose.msra.mxu0 0
  %425 = vmatpush.bf16.xpose.msra.mxu0 %v416
  %426 = vmatmul.bf16.gmra.mxu0 %v413
  %v427 = vpop.f32.mrf.mxu0
  %v428 = vadd.f32 0.0, %v427
  %v429 = vpop.f32.mrf.mxu0
  %430 = vdwg.mxu0
  %v431 = vadd.f32 %v401, %v428
  %s432 = scalar_lea.vmem %s0, 56
  %v433 = vld [vmem:[%s432] sm:$0xf]
  %s434 = scalar_lea.vmem %s1, 112
  %v435 = vld [vmem:[%s434] sm:$0xf]
  %v436 = vld [vmem:[%s434 + $0x4] sm:$0x1]
  %v439 = vunpack.c.l.b16 %v435
  %v440 = vunpack.c.l.b16 %v436
  %v441 = vpack.c.b16 %v440, %v439
  %v443 = vsel %vm28, %v433, 0
  %v446 = vsel %vm28, %v441, 0
  %448 = vmatpush.bf16.xpose.msra.mxu0 0
  %449 = vmatpush.bf16.xpose.msra.mxu0 0
  %450 = vmatpush.bf16.xpose.msra.mxu0 0
  %451 = vmatpush.bf16.xpose.msra.mxu0 0
  %452 = vmatpush.bf16.xpose.msra.mxu0 0
  %453 = vmatpush.bf16.xpose.msra.mxu0 0
  %454 = vmatpush.bf16.xpose.msra.mxu0 0
  %455 = vmatpush.bf16.xpose.msra.mxu0 %v446
  %456 = vmatmul.bf16.gmra.mxu0 %v443
  %v457 = vpop.f32.mrf.mxu0
  %v458 = vadd.f32 0.0, %v457
  %v459 = vpop.f32.mrf.mxu0
  %460 = vdwg.mxu0
  %v461 = vadd.f32 %v431, %v458
  %s462 = scalar_lea.vmem %s0, 60
  %v463 = vld [vmem:[%s462] sm:$0xf]
  %s464 = scalar_lea.vmem %s1, 120
  %v465 = vld [vmem:[%s464] sm:$0xf]
  %v466 = vld [vmem:[%s464 + $0x4] sm:$0x1]
  %v469 = vunpack.c.l.b16 %v465
  %v470 = vunpack.c.l.b16 %v466
  %v471 = vpack.c.b16 %v470, %v469
  %v473 = vsel %vm28, %v463, 0
  %v476 = vsel %vm28, %v471, 0
  %478 = vmatpush.bf16.xpose.msra.mxu0 0
  %479 = vmatpush.bf16.xpose.msra.mxu0 0
  %480 = vmatpush.bf16.xpose.msra.mxu0 0
  %481 = vmatpush.bf16.xpose.msra.mxu0 0
  %482 = vmatpush.bf16.xpose.msra.mxu0 0
  %483 = vmatpush.bf16.xpose.msra.mxu0 0
  %484 = vmatpush.bf16.xpose.msra.mxu0 0
  %485 = vmatpush.bf16.xpose.msra.mxu0 %v476
  %486 = vmatmul.bf16.gmra.mxu0 %v473
  %v487 = vpop.f32.mrf.mxu0
  %v488 = vadd.f32 0.0, %v487
  %v489 = vpop.f32.mrf.mxu0
  %490 = vdwg.mxu0
  %v491 = vadd.f32 %v461, %v488
  %s492 = scalar_lea.vmem %s0, 64
  %v493 = vld [vmem:[%s492] sm:$0xf]
  %s494 = scalar_lea.vmem %s1, 128
  %v495 = vld [vmem:[%s494] sm:$0xf]
  %v496 = vld [vmem:[%s494 + $0x4] sm:$0x1]
  %v499 = vunpack.c.l.b16 %v495
  %v500 = vunpack.c.l.b16 %v496
  %v501 = vpack.c.b16 %v500, %v499
  %v503 = vsel %vm28, %v493, 0
  %v506 = vsel %vm28, %v501, 0
  %508 = vmatpush.bf16.xpose.msra.mxu0 0
  %509 = vmatpush.bf16.xpose.msra.mxu0 0
  %510 = vmatpush.bf16.xpose.msra.mxu0 0
  %511 = vmatpush.bf16.xpose.msra.mxu0 0
  %512 = vmatpush.bf16.xpose.msra.mxu0 0
  %513 = vmatpush.bf16.xpose.msra.mxu0 0
  %514 = vmatpush.bf16.xpose.msra.mxu0 0
  %515 = vmatpush.bf16.xpose.msra.mxu0 %v506
  %516 = vmatmul.bf16.gmra.mxu0 %v503
  %v517 = vpop.f32.mrf.mxu0
  %v518 = vadd.f32 0.0, %v517
  %v519 = vpop.f32.mrf.mxu0
  %520 = vdwg.mxu0
  %v521 = vadd.f32 %v491, %v518
  %s522 = scalar_lea.vmem %s0, 68
  %v523 = vld [vmem:[%s522] sm:$0xf]
  %s524 = scalar_lea.vmem %s1, 136
  %v525 = vld [vmem:[%s524] sm:$0xf]
  %v526 = vld [vmem:[%s524 + $0x4] sm:$0x1]
  %v529 = vunpack.c.l.b16 %v525
  %v530 = vunpack.c.l.b16 %v526
  %v531 = vpack.c.b16 %v530, %v529
  %v533 = vsel %vm28, %v523, 0
  %v536 = vsel %vm28, %v531, 0
  %538 = vmatpush.bf16.xpose.msra.mxu0 0
  %539 = vmatpush.bf16.xpose.msra.mxu0 0
  %540 = vmatpush.bf16.xpose.msra.mxu0 0
  %541 = vmatpush.bf16.xpose.msra.mxu0 0
  %542 = vmatpush.bf16.xpose.msra.mxu0 0
  %543 = vmatpush.bf16.xpose.msra.mxu0 0
  %544 = vmatpush.bf16.xpose.msra.mxu0 0
  %545 = vmatpush.bf16.xpose.msra.mxu0 %v536
  %546 = vmatmul.bf16.gmra.mxu0 %v533
  %v547 = vpop.f32.mrf.mxu0
  %v548 = vadd.f32 0.0, %v547
  %v549 = vpop.f32.mrf.mxu0
  %550 = vdwg.mxu0
  %v551 = vadd.f32 %v521, %v548
  %s552 = scalar_lea.vmem %s0, 72
  %v553 = vld [vmem:[%s552] sm:$0xf]
  %s554 = scalar_lea.vmem %s1, 144
  %v555 = vld [vmem:[%s554] sm:$0xf]
  %v556 = vld [vmem:[%s554 + $0x4] sm:$0x1]
  %v559 = vunpack.c.l.b16 %v555
  %v560 = vunpack.c.l.b16 %v556
  %v561 = vpack.c.b16 %v560, %v559
  %v563 = vsel %vm28, %v553, 0
  %v566 = vsel %vm28, %v561, 0
  %568 = vmatpush.bf16.xpose.msra.mxu0 0
  %569 = vmatpush.bf16.xpose.msra.mxu0 0
  %570 = vmatpush.bf16.xpose.msra.mxu0 0
  %571 = vmatpush.bf16.xpose.msra.mxu0 0
  %572 = vmatpush.bf16.xpose.msra.mxu0 0
  %573 = vmatpush.bf16.xpose.msra.mxu0 0
  %574 = vmatpush.bf16.xpose.msra.mxu0 0
  %575 = vmatpush.bf16.xpose.msra.mxu0 %v566
  %576 = vmatmul.bf16.gmra.mxu0 %v563
  %v577 = vpop.f32.mrf.mxu0
  %v578 = vadd.f32 0.0, %v577
  %v579 = vpop.f32.mrf.mxu0
  %580 = vdwg.mxu0
  %v581 = vadd.f32 %v551, %v578
  %s582 = scalar_lea.vmem %s0, 76
  %v583 = vld [vmem:[%s582] sm:$0xf]
  %s584 = scalar_lea.vmem %s1, 152
  %v585 = vld [vmem:[%s584] sm:$0xf]
  %v586 = vld [vmem:[%s584 + $0x4] sm:$0x1]
  %v589 = vunpack.c.l.b16 %v585
  %v590 = vunpack.c.l.b16 %v586
  %v591 = vpack.c.b16 %v590, %v589
  %v593 = vsel %vm28, %v583, 0
  %v596 = vsel %vm28, %v591, 0
  %598 = vmatpush.bf16.xpose.msra.mxu0 0
  %599 = vmatpush.bf16.xpose.msra.mxu0 0
  %600 = vmatpush.bf16.xpose.msra.mxu0 0
  %601 = vmatpush.bf16.xpose.msra.mxu0 0
  %602 = vmatpush.bf16.xpose.msra.mxu0 0
  %603 = vmatpush.bf16.xpose.msra.mxu0 0
  %604 = vmatpush.bf16.xpose.msra.mxu0 0
  %605 = vmatpush.bf16.xpose.msra.mxu0 %v596
  %606 = vmatmul.bf16.gmra.mxu0 %v593
  %v607 = vpop.f32.mrf.mxu0
  %v608 = vadd.f32 0.0, %v607
  %v609 = vpop.f32.mrf.mxu0
  %610 = vdwg.mxu0
  %v611 = vadd.f32 %v581, %v608
  %v612 = vld [vmem:[%s2] sm:$0x1]
  %v614 = vperm.slane %v612, 0
  %v616 = vadd.f32 %v611, %v614
  %vm617 = vcmask 80896
  %v618 = vsel %vm617, %v616, -inf
  %619 = vmax.xlane.f32.xlu0 %v618
  %v620 = vpop.xlane.xlu0 %619
  %v621 = vsub.f32 %v616, %v620
  %v622 = vmul.f32 %v621, 1.442695
  %v623 = vpow.pop %v622
  %v624 = vsel %vm617, %v623, 0.0
  %625 = vadd.xlane.f32.xlu0 %v624
  %v626 = vpop.xlane.xlu0 %625
  %v627 = vlog2.pop %v626
  %v628 = vmul.f32 %v627, 0.6931472
  %v629 = vsub.f32 %v621, %v628
  %630 = vst.msk [vmem:[%s3] sm:$0xff] %vm617, %v629
  // Predicated region
  $region14: #{multilayer_cnn_pallas.5} parent=0 // pred_check
    _
  $region15: #{multilayer_cnn_pallas.5} parent=0 // pred_check_branch
    %632 = sbr.rel (0) target = $region17
  $region16: #{multilayer_cnn_pallas.5} parent=0 // pred_region
    _
  $region17: #{multilayer_cnn_pallas.5} parent=0 // pred_fallthru
    _
  // Predicated region
  $region18: #{multilayer_cnn_pallas.5} parent=0 // pred_check
    _
  $region19: #{multilayer_cnn_pallas.5} parent=0 // pred_check_branch
    %634 = sbr.rel (0) target = $region21
  $region20: #{multilayer_cnn_pallas.5} parent=0 // pred_region
    _
  $region21: #{multilayer_cnn_pallas.5} parent=0 // pred_fallthru
    _

</llo_original>
